<compile_context>
chip_gen: v5e
topology: v5e:2x2
jax: 0.10.0
libtpu: 0.0.40
codegen_flags: <defaults>
</compile_context>

<pallas_src>
import functools

import jax
import jax.numpy as jnp
from jax import lax
from jax.experimental import pallas as pl
from jax.experimental.pallas import tpu as pltpu


def _lstm_fc_kernel(x_ref, wih0_ref, whh0_ref, b0_ref,
                    wihr_ref, whhr_ref, br_ref,
                    wfc_ref, bfc_ref,
                    out_ref,
                    hseq_ref, gx_ref,
                    *, seq_len, chunk_len, batch, num_layers, unroll):
    T, Tc, Bc = seq_len, chunk_len, batch
    H = whh0_ref.shape[0]
    mm_dtype = wih0_ref.dtype           # matmul operand dtype (bf16 fast path)
    n_chunks = T // Tc

    h_last = None
    for l in range(num_layers):
        # ---- per-layer weight/bias loads, hoisted out of the time loop ----
        if l == 0:
            seq_ref = x_ref                       # (T*Bc, D)
            wih = wih0_ref[...]
            whh = whh0_ref[...]
            b = b0_ref[...]                       # (1, 4H) f32
        else:
            seq_ref = hseq_ref                    # previous layer's h sequence
            wih = wihr_ref[l - 1]
            whh = whhr_ref[l - 1]
            b = br_ref[l - 1]
        write_hseq = l < num_layers - 1           # last layer only needs h_T

        def chunk_step(c, carry):
            # input-side projection for one time chunk as a single MXU matmul
            crow = pl.multiple_of(c * (Tc * Bc), Tc * Bc)
            gx_ref[...] = (jnp.dot(
                seq_ref[pl.ds(crow, Tc * Bc), :].astype(mm_dtype), wih,
                preferred_element_type=jnp.float32) + b)      # (Tc*Bc, 4H) f32

            def step(tl, carry2):
                h_prev, c_prev = carry2
                row = pl.multiple_of(tl * Bc, Bc)
                # NOTE(perf): at real sizes the 5 transcendentals below make
                # this loop EUP-bound; confirm with a bundle dump before tuning
                # the matmul side further.
                gates = (gx_ref[pl.ds(row, Bc), :]
                         + jnp.dot(h_prev.astype(mm_dtype), whh,
                                   preferred_element_type=jnp.float32))
                # NOTE(perf): use H as a multiple of 128 in real deployments so
                # these gate slices / hseq stores are whole-vreg, unmasked ops.
                i = jax.nn.sigmoid(gates[:, 0 * H:1 * H])
                f = jax.nn.sigmoid(gates[:, 1 * H:2 * H])
                g = jnp.tanh(gates[:, 2 * H:3 * H])
                o = jax.nn.sigmoid(gates[:, 3 * H:4 * H])
                c_new = f * c_prev + i * g
                h_new = o * jnp.tanh(c_new)
                if write_hseq:
                    hseq_ref[pl.ds(crow + row, Bc), :] = (
                        h_new.astype(hseq_ref.dtype))
                return (h_new, c_new)

            return lax.fori_loop(0, Tc, step, carry, unroll=unroll)

        init = (jnp.zeros((Bc, H), jnp.float32),
                jnp.zeros((Bc, H), jnp.float32))
        h_last, _ = lax.fori_loop(0, n_chunks, chunk_step, init)

    # fc on the top layer's last hidden state: h_T @ W_fc^T + b_fc
    out_ref[...] = (jnp.dot(h_last.astype(mm_dtype), wfc_ref[...],
                            preferred_element_type=jnp.float32)
                    + bfc_ref[...])


def _pick_batch_chunk(bp, cap=64):
    """Largest multiple-of-8 divisor of bp not exceeding cap."""
    best, d = 8, 8
    while d <= min(bp, cap):
        if bp % d == 0:
            best = d
        d += 8
    return best


def _pick_time_chunk(t, bc, h, budget_bytes=8 << 20):
    """Largest divisor of t whose (Tc*Bc, 4H) f32 gx chunk fits the budget."""
    best = 1
    for tc in range(1, t + 1):
        if t % tc == 0 and tc * bc * 4 * h * 4 <= budget_bytes:
            best = tc
    return best


def lstm_speech_classifier_forward(x, params, *, matmul_dtype=jnp.bfloat16,
                                   unroll=None):
    """x: (B, T, D) float32, batch_first (as in the PyTorch module)."""
    wih0, whh0, b0, wihr, whhr, br, wfc, bfc = params
    B, T, D = x.shape
    H = whh0.shape[0]
    L = wihr.shape[0] + 1
    C = wfc.shape[1]
    assert L >= 2, "L == 1 needs a separate packing (see TODO at top)"

    # bf16 matmul operands (recommended on v6e/v7x); biases stay f32.
    cast = lambda w: w.astype(matmul_dtype)
    wih0, whh0, wihr, whhr, wfc = map(cast, (wih0, whh0, wihr, whhr, wfc))

    # Pad batch to a multiple of 8 sublanes; extra rows are zeros and ignored.
    Bp = max(8, ((B + 7) // 8) * 8)
    Bc = _pick_batch_chunk(Bp)            # per-grid-step batch chunk
    nb = Bp // Bc
    Tc = _pick_time_chunk(T, Bc, H)       # gx computed in Tc-sized time chunks

    # (B, T, D) -> per-batch-chunk, time-major flattened rows:
    # x_r[bc, t*Bc + j, :] = x[bc*Bc + j, t, :]
    x_p = jnp.zeros((Bp, T, D), matmul_dtype).at[:B].set(x.astype(matmul_dtype))
    x_r = (x_p.reshape(nb, Bc, T, D)
              .transpose(0, 2, 1, 3)
              .reshape(nb, T * Bc, D))

    if unroll is None:
        # Keep unrolling modest once the live state stops fitting in vregs.
        unroll = min(Tc, 8) if Bc * H * 4 <= 64 * 1024 else 2

    kernel = functools.partial(_lstm_fc_kernel, seq_len=T, chunk_len=Tc,
                               batch=Bc, num_layers=L, unroll=unroll)

    def _full_spec(arr):
        zeros = (0,) * arr.ndim
        return pl.BlockSpec(arr.shape, lambda b, _z=zeros: _z)

    in_specs = [
        pl.BlockSpec((None, T * Bc, D), lambda b: (b, 0, 0)),   # x batch chunk
        _full_spec(wih0), _full_spec(whh0), _full_spec(b0),
        _full_spec(wihr), _full_spec(whhr), _full_spec(br),
        _full_spec(wfc), _full_spec(bfc),
    ]
    out_specs = pl.BlockSpec((Bc, C), lambda b: (b, 0))

    # Size the scoped VMEM limit from the real footprint (+ headroom).
    mm_item = jnp.dtype(matmul_dtype).itemsize
    w_bytes = sum(int(a.size) * a.dtype.itemsize
                  for a in (wih0, whh0, b0, wihr, whhr, br, wfc, bfc))
    in_bytes = T * Bc * D * mm_item
    scratch_bytes = T * Bc * H * mm_item + Tc * Bc * 4 * H * 4
    out_bytes = Bc * C * 4
    total = 2 * (in_bytes + w_bytes + out_bytes) + scratch_bytes + (4 << 20)
    vmem_limit = int(min(64 << 20, max(32 << 20, total)))

    out_p = pl.pallas_call(
        kernel,
        out_shape=jax.ShapeDtypeStruct((Bp, C), jnp.float32),
        grid_spec=pltpu.PrefetchScalarGridSpec(
            num_scalar_prefetch=0,
            grid=(nb,),
            in_specs=in_specs,
            out_specs=out_specs,
            scratch_shapes=[
                pltpu.VMEM((T * Bc, H), matmul_dtype),       # per-layer h seq
                pltpu.VMEM((Tc * Bc, 4 * H), jnp.float32),   # gx time chunk
            ]),
        compiler_params=pltpu.CompilerParams(
            dimension_semantics=("parallel",),
            vmem_limit_bytes=vmem_limit),
    )(x_r, wih0, whh0, b0, wihr, whhr, br, wfc, bfc)
    return out_p[:B]


def init_params(key, input_size, hidden_size, num_layers, num_classes):
    """Deterministic synthetic init matching nn.LSTM / nn.Linear shapes."""
    assert num_layers >= 2, "this packing stacks layers 1..L-1 together"
    H = hidden_size
    scale = 1.0 / jnp.sqrt(jnp.float32(H))
    keys = iter(jax.random.split(key, 4 * num_layers + 2))

    def u(k, shape):
        return jax.random.uniform(k, shape, jnp.float32, -scale, scale)

    # layer 0: weight_ih_l0 (4H, D) -> stored transposed (D, 4H)
    wih0 = u(next(keys), (input_size, 4 * H))
    whh0 = u(next(keys), (H, 4 * H))
    b0 = u(next(keys), (1, 4 * H)) + u(next(keys), (1, 4 * H))   # b_ih + b_hh

    wihr, whhr, br = [], [], []
    for _ in range(num_layers - 1):
        wihr.append(u(next(keys), (H, 4 * H)))
        whhr.append(u(next(keys), (H, 4 * H)))
        br.append(u(next(keys), (1, 4 * H)) + u(next(keys), (1, 4 * H)))
    wihr = jnp.stack(wihr)          # (L-1, H, 4H)
    whhr = jnp.stack(whhr)          # (L-1, H, 4H)
    br = jnp.stack(br)              # (L-1, 1, 4H)

    # fc: weight (C, H) -> stored transposed (H, C); bias (C,) -> (1, C)
    wfc = u(next(keys), (H, num_classes))
    bfc = u(next(keys), (1, num_classes))
    return (wih0, whh0, b0, wihr, whhr, br, wfc, bfc)


def reference_forward(x, params):
    """Pure-JAX f32 reference reproducing PyTorch nn.LSTM + fc semantics."""
    wih0, whh0, b0, wihr, whhr, br, wfc, bfc = params
    B, T, D = x.shape
    H = whh0.shape[0]
    L = wihr.shape[0] + 1
    h = jnp.zeros((L, B, H), jnp.float32)
    c = jnp.zeros((L, B, H), jnp.float32)
    inp = None
    for t in range(T):
        inp = x[:, t, :]
        new_h, new_c = [], []
        for l in range(L):
            wih = wih0 if l == 0 else wihr[l - 1]
            whh = whh0 if l == 0 else whhr[l - 1]
            b = b0 if l == 0 else br[l - 1]
            gates = inp @ wih + h[l] @ whh + b
            i = jax.nn.sigmoid(gates[:, :H])
            f = jax.nn.sigmoid(gates[:, H:2 * H])
            g = jnp.tanh(gates[:, 2 * H:3 * H])
            o = jax.nn.sigmoid(gates[:, 3 * H:4 * H])
            cn = f * c[l] + i * g
            hn = o * jnp.tanh(cn)
            new_h.append(hn)
            new_c.append(cn)
            inp = hn
        h = jnp.stack(new_h)
        c = jnp.stack(new_c)
    return inp @ wfc + bfc


if __name__ == "__main__":
    # Small shapes implied by the module: (batch, seq, input_size) -> (batch, num_classes)
    B, T, D = 2, 8, 16
    H, L, C = 32, 2, 10

    key = jax.random.PRNGKey(0)
    kx, kp = jax.random.split(key)
    x = jax.random.normal(kx, (B, T, D), jnp.float32)
    params = init_params(kp, D, H, L, C)

    ref = reference_forward(x, params)

    # Strict check on the f32 operand path.
    out_f32 = jax.block_until_ready(
        jax.jit(functools.partial(lstm_speech_classifier_forward,
                                  matmul_dtype=jnp.float32))(x, params))
    assert out_f32.shape == (B, C)
    assert jnp.allclose(out_f32, ref, rtol=1e-4, atol=1e-4), (out_f32, ref)

    # Default fast path: bf16 matmul operands, f32 accumulation (looser tol).
    out_bf16 = jax.block_until_ready(
        jax.jit(lstm_speech_classifier_forward)(x, params))
    assert out_bf16.shape == (B, C)
    assert jnp.allclose(out_bf16, ref, rtol=5e-2, atol=5e-2), (out_bf16, ref)

    print("KERNEL_OK")
</pallas_src>

<mosaic_0001>
module attributes {stable_mosaic.version = 11 : i64} {
  func.func @_lstm_fc_kernel(%arg0: i32, %arg1: memref<1x64x16xf32, #tpu.memory_space<vmem>>, %arg2: memref<16x128xf32, #tpu.memory_space<vmem>>, %arg3: memref<32x128xf32, #tpu.memory_space<vmem>>, %arg4: memref<1x128xf32, #tpu.memory_space<vmem>>, %arg5: memref<1x32x128xf32, #tpu.memory_space<vmem>>, %arg6: memref<1x32x128xf32, #tpu.memory_space<vmem>>, %arg7: memref<1x1x128xf32, #tpu.memory_space<vmem>>, %arg8: memref<32x10xf32, #tpu.memory_space<vmem>>, %arg9: memref<1x10xf32, #tpu.memory_space<vmem>>, %arg10: memref<8x10xf32, #tpu.memory_space<vmem>>, %arg11: memref<64x32xf32, #tpu.memory_space<vmem>>, %arg12: memref<64x128xf32, #tpu.memory_space<vmem>>) attributes {dimension_semantics = [#tpu.dimension_semantics<parallel>], iteration_bounds = array<i64: 1>, scalar_prefetch = 0 : i64, scratch_operands = 2 : i64, tpu.core_type = #tpu.core_type<tc>, window_params = [{transform_indices = @transform_0, window_bounds = array<i64: 1, 64, 16>}, {pipeline_mode = #tpu.pipeline_mode<synchronous>, transform_indices = @transform_1, window_bounds = array<i64: 16, 128>}, {pipeline_mode = #tpu.pipeline_mode<synchronous>, transform_indices = @transform_2, window_bounds = array<i64: 32, 128>}, {pipeline_mode = #tpu.pipeline_mode<synchronous>, transform_indices = @transform_3, window_bounds = array<i64: 1, 128>}, {pipeline_mode = #tpu.pipeline_mode<synchronous>, transform_indices = @transform_4, window_bounds = array<i64: 1, 32, 128>}, {pipeline_mode = #tpu.pipeline_mode<synchronous>, transform_indices = @transform_5, window_bounds = array<i64: 1, 32, 128>}, {pipeline_mode = #tpu.pipeline_mode<synchronous>, transform_indices = @transform_6, window_bounds = array<i64: 1, 1, 128>}, {pipeline_mode = #tpu.pipeline_mode<synchronous>, transform_indices = @transform_7, window_bounds = array<i64: 32, 10>}, {pipeline_mode = #tpu.pipeline_mode<synchronous>, transform_indices = @transform_8, window_bounds = array<i64: 1, 10>}, {transform_indices = @transform_9, window_bounds = array<i64: 8, 10>}]} {
    %c0 = arith.constant 0 : index
    %c0_0 = arith.constant 0 : index
    %0 = vector.load %arg2[%c0, %c0_0] : memref<16x128xf32, #tpu.memory_space<vmem>>, vector<16x128xf32>
    %c0_1 = arith.constant 0 : index
    %c0_2 = arith.constant 0 : index
    %1 = vector.load %arg3[%c0_1, %c0_2] : memref<32x128xf32, #tpu.memory_space<vmem>>, vector<32x128xf32>
    %c0_3 = arith.constant 0 : index
    %c0_4 = arith.constant 0 : index
    %2 = vector.load %arg4[%c0_3, %c0_4] : memref<1x128xf32, #tpu.memory_space<vmem>>, vector<1x128xf32>
    %cst = arith.constant 0.000000e+00 : f32
    %3 = vector.broadcast %cst : f32 to vector<8x32xf32>
    %cst_5 = arith.constant 0.000000e+00 : f32
    %4 = vector.broadcast %cst_5 : f32 to vector<8x32xf32>
    %c0_i32 = arith.constant 0 : i32
    %c64_i32 = arith.constant 64 : i32
    %5 = arith.muli %c0_i32, %c64_i32 : i32
    %6 = tpu.assume_multiple %5, 64 : i32
    %c0_6 = arith.constant 0 : index
    %7 = arith.index_cast %6 : i32 to index
    %c0_7 = arith.constant 0 : index
    %8 = vector.load %arg1[%c0_6, %7, %c0_7] : memref<1x64x16xf32, #tpu.memory_space<vmem>>, vector<1x64x16xf32>
    %9 = vector.shape_cast %8 : vector<1x64x16xf32> to vector<64x16xf32>
    %cst_8 = arith.constant dense<0.000000e+00> : vector<64x128xf32>
    %10 = tpu.matmul %9, %0, %cst_8 {dimension_numbers = #tpu.dot_dimension_numbers<[1], [0], [0], [1], [0, 0, 1, 1], [], []>} : vector<64x16xf32>, vector<16x128xf32>, vector<64x128xf32> -> vector<64x128xf32>
    %11 = vector.broadcast %2 : vector<1x128xf32> to vector<64x128xf32>
    %12 = arith.addf %10, %11 : vector<64x128xf32>
    %c0_9 = arith.constant 0 : index
    %c0_10 = arith.constant 0 : index
    %13 = vector.load %arg12[%c0_9, %c0_10] : memref<64x128xf32, #tpu.memory_space<vmem>>, vector<64x128xf32>
    tpu.vector_store %arg12[%c0_9, %c0_10], %12 {strides = array<i32>} : memref<64x128xf32, #tpu.memory_space<vmem>>, vector<64x128xf32>,
    %c0_i32_11 = arith.constant 0 : i32
    %c8_i32 = arith.constant 8 : i32
    %14 = arith.muli %c0_i32_11, %c8_i32 : i32
    %15 = tpu.assume_multiple %14, 8 : i32
    %16 = arith.index_cast %15 : i32 to index
    %c0_12 = arith.constant 0 : index
    %17 = vector.load %arg12[%16, %c0_12] : memref<64x128xf32, #tpu.memory_space<vmem>>, vector<8x128xf32>
    %cst_13 = arith.constant dense<0.000000e+00> : vector<8x128xf32>
    %18 = tpu.matmul %3, %1, %cst_13 {dimension_numbers = #tpu.dot_dimension_numbers<[1], [0], [0], [1], [0, 0, 1, 1], [], []>} : vector<8x32xf32>, vector<32x128xf32>, vector<8x128xf32> -> vector<8x128xf32>
    %19 = arith.addf %17, %18 : vector<8x128xf32>
    %20 = vector.extract_strided_slice %19 {offsets = [0, 0], sizes = [8, 32], strides = [1, 1]} : vector<8x128xf32> to vector<8x32xf32>
    %21 = arith.negf %20 : vector<8x32xf32>
    %22 = math.exp %21 : vector<8x32xf32>
    %cst_14 = arith.constant 1.000000e+00 : f32
    %23 = vector.broadcast %cst_14 : f32 to vector<8x32xf32>
    %24 = arith.addf %23, %22 : vector<8x32xf32>
    %25 = arith.divf %23, %24 : vector<8x32xf32>
    %26 = vector.extract_strided_slice %19 {offsets = [0, 32], sizes = [8, 32], strides = [1, 1]} : vector<8x128xf32> to vector<8x32xf32>
    %27 = arith.negf %26 : vector<8x32xf32>
    %28 = math.exp %27 : vector<8x32xf32>
    %cst_15 = arith.constant 1.000000e+00 : f32
    %29 = vector.broadcast %cst_15 : f32 to vector<8x32xf32>
    %30 = arith.addf %29, %28 : vector<8x32xf32>
    %31 = arith.divf %29, %30 : vector<8x32xf32>
    %32 = vector.extract_strided_slice %19 {offsets = [0, 64], sizes = [8, 32], strides = [1, 1]} : vector<8x128xf32> to vector<8x32xf32>
    %33 = math.tanh %32 : vector<8x32xf32>
    %34 = vector.extract_strided_slice %19 {offsets = [0, 96], sizes = [8, 32], strides = [1, 1]} : vector<8x128xf32> to vector<8x32xf32>
    %35 = arith.negf %34 : vector<8x32xf32>
    %36 = math.exp %35 : vector<8x32xf32>
    %cst_16 = arith.constant 1.000000e+00 : f32
    %37 = vector.broadcast %cst_16 : f32 to vector<8x32xf32>
    %38 = arith.addf %37, %36 : vector<8x32xf32>
    %39 = arith.divf %37, %38 : vector<8x32xf32>
    %40 = arith.mulf %31, %4 : vector<8x32xf32>
    %41 = arith.mulf %25, %33 : vector<8x32xf32>
    %42 = arith.addf %40, %41 : vector<8x32xf32>
    %43 = math.tanh %42 : vector<8x32xf32>
    %44 = arith.mulf %39, %43 : vector<8x32xf32>
    %45 = arith.addi %6, %15 : i32
    %46 = arith.index_cast %45 : i32 to index
    %c0_17 = arith.constant 0 : index
    %47 = vector.load %arg11[%46, %c0_17] : memref<64x32xf32, #tpu.memory_space<vmem>>, vector<8x32xf32>
    tpu.vector_store %arg11[%46, %c0_17], %44 {strides = array<i32>} : memref<64x32xf32, #tpu.memory_space<vmem>>, vector<8x32xf32>,
    %c1_i32 = arith.constant 1 : i32
    %c8_i32_18 = arith.constant 8 : i32
    %48 = arith.muli %c1_i32, %c8_i32_18 : i32
    %49 = tpu.assume_multiple %48, 8 : i32
    %50 = arith.index_cast %49 : i32 to index
    %c0_19 = arith.constant 0 : index
    %51 = vector.load %arg12[%50, %c0_19] : memref<64x128xf32, #tpu.memory_space<vmem>>, vector<8x128xf32>
    %cst_20 = arith.constant dense<0.000000e+00> : vector<8x128xf32>
    %52 = tpu.matmul %44, %1, %cst_20 {dimension_numbers = #tpu.dot_dimension_numbers<[1], [0], [0], [1], [0, 0, 1, 1], [], []>} : vector<8x32xf32>, vector<32x128xf32>, vector<8x128xf32> -> vector<8x128xf32>
    %53 = arith.addf %51, %52 : vector<8x128xf32>
    %54 = vector.extract_strided_slice %53 {offsets = [0, 0], sizes = [8, 32], strides = [1, 1]} : vector<8x128xf32> to vector<8x32xf32>
    %55 = arith.negf %54 : vector<8x32xf32>
    %56 = math.exp %55 : vector<8x32xf32>
    %cst_21 = arith.constant 1.000000e+00 : f32
    %57 = vector.broadcast %cst_21 : f32 to vector<8x32xf32>
    %58 = arith.addf %57, %56 : vector<8x32xf32>
    %59 = arith.divf %57, %58 : vector<8x32xf32>
    %60 = vector.extract_strided_slice %53 {offsets = [0, 32], sizes = [8, 32], strides = [1, 1]} : vector<8x128xf32> to vector<8x32xf32>
    %61 = arith.negf %60 : vector<8x32xf32>
    %62 = math.exp %61 : vector<8x32xf32>
    %cst_22 = arith.constant 1.000000e+00 : f32
    %63 = vector.broadcast %cst_22 : f32 to vector<8x32xf32>
    %64 = arith.addf %63, %62 : vector<8x32xf32>
    %65 = arith.divf %63, %64 : vector<8x32xf32>
    %66 = vector.extract_strided_slice %53 {offsets = [0, 64], sizes = [8, 32], strides = [1, 1]} : vector<8x128xf32> to vector<8x32xf32>
    %67 = math.tanh %66 : vector<8x32xf32>
    %68 = vector.extract_strided_slice %53 {offsets = [0, 96], sizes = [8, 32], strides = [1, 1]} : vector<8x128xf32> to vector<8x32xf32>
    %69 = arith.negf %68 : vector<8x32xf32>
    %70 = math.exp %69 : vector<8x32xf32>
    %cst_23 = arith.constant 1.000000e+00 : f32
    %71 = vector.broadcast %cst_23 : f32 to vector<8x32xf32>
    %72 = arith.addf %71, %70 : vector<8x32xf32>
    %73 = arith.divf %71, %72 : vector<8x32xf32>
    %74 = arith.mulf %65, %42 : vector<8x32xf32>
    %75 = arith.mulf %59, %67 : vector<8x32xf32>
    %76 = arith.addf %74, %75 : vector<8x32xf32>
    %77 = math.tanh %76 : vector<8x32xf32>
    %78 = arith.mulf %73, %77 : vector<8x32xf32>
    %79 = arith.addi %6, %49 : i32
    %80 = arith.index_cast %79 : i32 to index
    %c0_24 = arith.constant 0 : index
    %81 = vector.load %arg11[%80, %c0_24] : memref<64x32xf32, #tpu.memory_space<vmem>>, vector<8x32xf32>
    tpu.vector_store %arg11[%80, %c0_24], %78 {strides = array<i32>} : memref<64x32xf32, #tpu.memory_space<vmem>>, vector<8x32xf32>,
    %c2_i32 = arith.constant 2 : i32
    %c8_i32_25 = arith.constant 8 : i32
    %82 = arith.muli %c2_i32, %c8_i32_25 : i32
    %83 = tpu.assume_multiple %82, 8 : i32
    %84 = arith.index_cast %83 : i32 to index
    %c0_26 = arith.constant 0 : index
    %85 = vector.load %arg12[%84, %c0_26] : memref<64x128xf32, #tpu.memory_space<vmem>>, vector<8x128xf32>
    %cst_27 = arith.constant dense<0.000000e+00> : vector<8x128xf32>
    %86 = tpu.matmul %78, %1, %cst_27 {dimension_numbers = #tpu.dot_dimension_numbers<[1], [0], [0], [1], [0, 0, 1, 1], [], []>} : vector<8x32xf32>, vector<32x128xf32>, vector<8x128xf32> -> vector<8x128xf32>
    %87 = arith.addf %85, %86 : vector<8x128xf32>
    %88 = vector.extract_strided_slice %87 {offsets = [0, 0], sizes = [8, 32], strides = [1, 1]} : vector<8x128xf32> to vector<8x32xf32>
    %89 = arith.negf %88 : vector<8x32xf32>
    %90 = math.exp %89 : vector<8x32xf32>
    %cst_28 = arith.constant 1.000000e+00 : f32
    %91 = vector.broadcast %cst_28 : f32 to vector<8x32xf32>
    %92 = arith.addf %91, %90 : vector<8x32xf32>
    %93 = arith.divf %91, %92 : vector<8x32xf32>
    %94 = vector.extract_strided_slice %87 {offsets = [0, 32], sizes = [8, 32], strides = [1, 1]} : vector<8x128xf32> to vector<8x32xf32>
    %95 = arith.negf %94 : vector<8x32xf32>
    %96 = math.exp %95 : vector<8x32xf32>
    %cst_29 = arith.constant 1.000000e+00 : f32
    %97 = vector.broadcast %cst_29 : f32 to vector<8x32xf32>
    %98 = arith.addf %97, %96 : vector<8x32xf32>
    %99 = arith.divf %97, %98 : vector<8x32xf32>
    %100 = vector.extract_strided_slice %87 {offsets = [0, 64], sizes = [8, 32], strides = [1, 1]} : vector<8x128xf32> to vector<8x32xf32>
    %101 = math.tanh %100 : vector<8x32xf32>
    %102 = vector.extract_strided_slice %87 {offsets = [0, 96], sizes = [8, 32], strides = [1, 1]} : vector<8x128xf32> to vector<8x32xf32>
    %103 = arith.negf %102 : vector<8x32xf32>
    %104 = math.exp %103 : vector<8x32xf32>
    %cst_30 = arith.constant 1.000000e+00 : f32
    %105 = vector.broadcast %cst_30 : f32 to vector<8x32xf32>
    %106 = arith.addf %105, %104 : vector<8x32xf32>
    %107 = arith.divf %105, %106 : vector<8x32xf32>
    %108 = arith.mulf %99, %76 : vector<8x32xf32>
    %109 = arith.mulf %93, %101 : vector<8x32xf32>
    %110 = arith.addf %108, %109 : vector<8x32xf32>
    %111 = math.tanh %110 : vector<8x32xf32>
    %112 = arith.mulf %107, %111 : vector<8x32xf32>
    %113 = arith.addi %6, %83 : i32
    %114 = arith.index_cast %113 : i32 to index
    %c0_31 = arith.constant 0 : index
    %115 = vector.load %arg11[%114, %c0_31] : memref<64x32xf32, #tpu.memory_space<vmem>>, vector<8x32xf32>
    tpu.vector_store %arg11[%114, %c0_31], %112 {strides = array<i32>} : memref<64x32xf32, #tpu.memory_space<vmem>>, vector<8x32xf32>,
    %c3_i32 = arith.constant 3 : i32
    %c8_i32_32 = arith.constant 8 : i32
    %116 = arith.muli %c3_i32, %c8_i32_32 : i32
    %117 = tpu.assume_multiple %116, 8 : i32
    %118 = arith.index_cast %117 : i32 to index
    %c0_33 = arith.constant 0 : index
    %119 = vector.load %arg12[%118, %c0_33] : memref<64x128xf32, #tpu.memory_space<vmem>>, vector<8x128xf32>
    %cst_34 = arith.constant dense<0.000000e+00> : vector<8x128xf32>
    %120 = tpu.matmul %112, %1, %cst_34 {dimension_numbers = #tpu.dot_dimension_numbers<[1], [0], [0], [1], [0, 0, 1, 1], [], []>} : vector<8x32xf32>, vector<32x128xf32>, vector<8x128xf32> -> vector<8x128xf32>
    %121 = arith.addf %119, %120 : vector<8x128xf32>
    %122 = vector.extract_strided_slice %121 {offsets = [0, 0], sizes = [8, 32], strides = [1, 1]} : vector<8x128xf32> to vector<8x32xf32>
    %123 = arith.negf %122 : vector<8x32xf32>
    %124 = math.exp %123 : vector<8x32xf32>
    %cst_35 = arith.constant 1.000000e+00 : f32
    %125 = vector.broadcast %cst_35 : f32 to vector<8x32xf32>
    %126 = arith.addf %125, %124 : vector<8x32xf32>
    %127 = arith.divf %125, %126 : vector<8x32xf32>
    %128 = vector.extract_strided_slice %121 {offsets = [0, 32], sizes = [8, 32], strides = [1, 1]} : vector<8x128xf32> to vector<8x32xf32>
    %129 = arith.negf %128 : vector<8x32xf32>
    %130 = math.exp %129 : vector<8x32xf32>
    %cst_36 = arith.constant 1.000000e+00 : f32
    %131 = vector.broadcast %cst_36 : f32 to vector<8x32xf32>
    %132 = arith.addf %131, %130 : vector<8x32xf32>
    %133 = arith.divf %131, %132 : vector<8x32xf32>
    %134 = vector.extract_strided_slice %121 {offsets = [0, 64], sizes = [8, 32], strides = [1, 1]} : vector<8x128xf32> to vector<8x32xf32>
    %135 = math.tanh %134 : vector<8x32xf32>
    %136 = vector.extract_strided_slice %121 {offsets = [0, 96], sizes = [8, 32], strides = [1, 1]} : vector<8x128xf32> to vector<8x32xf32>
    %137 = arith.negf %136 : vector<8x32xf32>
    %138 = math.exp %137 : vector<8x32xf32>
    %cst_37 = arith.constant 1.000000e+00 : f32
    %139 = vector.broadcast %cst_37 : f32 to vector<8x32xf32>
    %140 = arith.addf %139, %138 : vector<8x32xf32>
    %141 = arith.divf %139, %140 : vector<8x32xf32>
    %142 = arith.mulf %133, %110 : vector<8x32xf32>
    %143 = arith.mulf %127, %135 : vector<8x32xf32>
    %144 = arith.addf %142, %143 : vector<8x32xf32>
    %145 = math.tanh %144 : vector<8x32xf32>
    %146 = arith.mulf %141, %145 : vector<8x32xf32>
    %147 = arith.addi %6, %117 : i32
    %148 = arith.index_cast %147 : i32 to index
    %c0_38 = arith.constant 0 : index
    %149 = vector.load %arg11[%148, %c0_38] : memref<64x32xf32, #tpu.memory_space<vmem>>, vector<8x32xf32>
    tpu.vector_store %arg11[%148, %c0_38], %146 {strides = array<i32>} : memref<64x32xf32, #tpu.memory_space<vmem>>, vector<8x32xf32>,
    %c4_i32 = arith.constant 4 : i32
    %c8_i32_39 = arith.constant 8 : i32
    %150 = arith.muli %c4_i32, %c8_i32_39 : i32
    %151 = tpu.assume_multiple %150, 8 : i32
    %152 = arith.index_cast %151 : i32 to index
    %c0_40 = arith.constant 0 : index
    %153 = vector.load %arg12[%152, %c0_40] : memref<64x128xf32, #tpu.memory_space<vmem>>, vector<8x128xf32>
    %cst_41 = arith.constant dense<0.000000e+00> : vector<8x128xf32>
    %154 = tpu.matmul %146, %1, %cst_41 {dimension_numbers = #tpu.dot_dimension_numbers<[1], [0], [0], [1], [0, 0, 1, 1], [], []>} : vector<8x32xf32>, vector<32x128xf32>, vector<8x128xf32> -> vector<8x128xf32>
    %155 = arith.addf %153, %154 : vector<8x128xf32>
    %156 = vector.extract_strided_slice %155 {offsets = [0, 0], sizes = [8, 32], strides = [1, 1]} : vector<8x128xf32> to vector<8x32xf32>
    %157 = arith.negf %156 : vector<8x32xf32>
    %158 = math.exp %157 : vector<8x32xf32>
    %cst_42 = arith.constant 1.000000e+00 : f32
    %159 = vector.broadcast %cst_42 : f32 to vector<8x32xf32>
    %160 = arith.addf %159, %158 : vector<8x32xf32>
    %161 = arith.divf %159, %160 : vector<8x32xf32>
    %162 = vector.extract_strided_slice %155 {offsets = [0, 32], sizes = [8, 32], strides = [1, 1]} : vector<8x128xf32> to vector<8x32xf32>
    %163 = arith.negf %162 : vector<8x32xf32>
    %164 = math.exp %163 : vector<8x32xf32>
    %cst_43 = arith.constant 1.000000e+00 : f32
    %165 = vector.broadcast %cst_43 : f32 to vector<8x32xf32>
    %166 = arith.addf %165, %164 : vector<8x32xf32>
    %167 = arith.divf %165, %166 : vector<8x32xf32>
    %168 = vector.extract_strided_slice %155 {offsets = [0, 64], sizes = [8, 32], strides = [1, 1]} : vector<8x128xf32> to vector<8x32xf32>
    %169 = math.tanh %168 : vector<8x32xf32>
    %170 = vector.extract_strided_slice %155 {offsets = [0, 96], sizes = [8, 32], strides = [1, 1]} : vector<8x128xf32> to vector<8x32xf32>
    %171 = arith.negf %170 : vector<8x32xf32>
    %172 = math.exp %171 : vector<8x32xf32>
    %cst_44 = arith.constant 1.000000e+00 : f32
    %173 = vector.broadcast %cst_44 : f32 to vector<8x32xf32>
    %174 = arith.addf %173, %172 : vector<8x32xf32>
    %175 = arith.divf %173, %174 : vector<8x32xf32>
    %176 = arith.mulf %167, %144 : vector<8x32xf32>
    %177 = arith.mulf %161, %169 : vector<8x32xf32>
    %178 = arith.addf %176, %177 : vector<8x32xf32>
    %179 = math.tanh %178 : vector<8x32xf32>
    %180 = arith.mulf %175, %179 : vector<8x32xf32>
    %181 = arith.addi %6, %151 : i32
    %182 = arith.index_cast %181 : i32 to index
    %c0_45 = arith.constant 0 : index
    %183 = vector.load %arg11[%182, %c0_45] : memref<64x32xf32, #tpu.memory_space<vmem>>, vector<8x32xf32>
    tpu.vector_store %arg11[%182, %c0_45], %180 {strides = array<i32>} : memref<64x32xf32, #tpu.memory_space<vmem>>, vector<8x32xf32>,
    %c5_i32 = arith.constant 5 : i32
    %c8_i32_46 = arith.constant 8 : i32
    %184 = arith.muli %c5_i32, %c8_i32_46 : i32
    %185 = tpu.assume_multiple %184, 8 : i32
    %186 = arith.index_cast %185 : i32 to index
    %c0_47 = arith.constant 0 : index
    %187 = vector.load %arg12[%186, %c0_47] : memref<64x128xf32, #tpu.memory_space<vmem>>, vector<8x128xf32>
    %cst_48 = arith.constant dense<0.000000e+00> : vector<8x128xf32>
    %188 = tpu.matmul %180, %1, %cst_48 {dimension_numbers = #tpu.dot_dimension_numbers<[1], [0], [0], [1], [0, 0, 1, 1], [], []>} : vector<8x32xf32>, vector<32x128xf32>, vector<8x128xf32> -> vector<8x128xf32>
    %189 = arith.addf %187, %188 : vector<8x128xf32>
    %190 = vector.extract_strided_slice %189 {offsets = [0, 0], sizes = [8, 32], strides = [1, 1]} : vector<8x128xf32> to vector<8x32xf32>
    %191 = arith.negf %190 : vector<8x32xf32>
    %192 = math.exp %191 : vector<8x32xf32>
    %cst_49 = arith.constant 1.000000e+00 : f32
    %193 = vector.broadcast %cst_49 : f32 to vector<8x32xf32>
    %194 = arith.addf %193, %192 : vector<8x32xf32>
    %195 = arith.divf %193, %194 : vector<8x32xf32>
    %196 = vector.extract_strided_slice %189 {offsets = [0, 32], sizes = [8, 32], strides = [1, 1]} : vector<8x128xf32> to vector<8x32xf32>
    %197 = arith.negf %196 : vector<8x32xf32>
    %198 = math.exp %197 : vector<8x32xf32>
    %cst_50 = arith.constant 1.000000e+00 : f32
    %199 = vector.broadcast %cst_50 : f32 to vector<8x32xf32>
    %200 = arith.addf %199, %198 : vector<8x32xf32>
    %201 = arith.divf %199, %200 : vector<8x32xf32>
    %202 = vector.extract_strided_slice %189 {offsets = [0, 64], sizes = [8, 32], strides = [1, 1]} : vector<8x128xf32> to vector<8x32xf32>
    %203 = math.tanh %202 : vector<8x32xf32>
    %204 = vector.extract_strided_slice %189 {offsets = [0, 96], sizes = [8, 32], strides = [1, 1]} : vector<8x128xf32> to vector<8x32xf32>
    %205 = arith.negf %204 : vector<8x32xf32>
    %206 = math.exp %205 : vector<8x32xf32>
    %cst_51 = arith.constant 1.000000e+00 : f32
    %207 = vector.broadcast %cst_51 : f32 to vector<8x32xf32>
    %208 = arith.addf %207, %206 : vector<8x32xf32>
    %209 = arith.divf %207, %208 : vector<8x32xf32>
    %210 = arith.mulf %201, %178 : vector<8x32xf32>
    %211 = arith.mulf %195, %203 : vector<8x32xf32>
    %212 = arith.addf %210, %211 : vector<8x32xf32>
    %213 = math.tanh %212 : vector<8x32xf32>
    %214 = arith.mulf %209, %213 : vector<8x32xf32>
    %215 = arith.addi %6, %185 : i32
    %216 = arith.index_cast %215 : i32 to index
    %c0_52 = arith.constant 0 : index
    %217 = vector.load %arg11[%216, %c0_52] : memref<64x32xf32, #tpu.memory_space<vmem>>, vector<8x32xf32>
    tpu.vector_store %arg11[%216, %c0_52], %214 {strides = array<i32>} : memref<64x32xf32, #tpu.memory_space<vmem>>, vector<8x32xf32>,
    %c6_i32 = arith.constant 6 : i32
    %c8_i32_53 = arith.constant 8 : i32
    %218 = arith.muli %c6_i32, %c8_i32_53 : i32
    %219 = tpu.assume_multiple %218, 8 : i32
    %220 = arith.index_cast %219 : i32 to index
    %c0_54 = arith.constant 0 : index
    %221 = vector.load %arg12[%220, %c0_54] : memref<64x128xf32, #tpu.memory_space<vmem>>, vector<8x128xf32>
    %cst_55 = arith.constant dense<0.000000e+00> : vector<8x128xf32>
    %222 = tpu.matmul %214, %1, %cst_55 {dimension_numbers = #tpu.dot_dimension_numbers<[1], [0], [0], [1], [0, 0, 1, 1], [], []>} : vector<8x32xf32>, vector<32x128xf32>, vector<8x128xf32> -> vector<8x128xf32>
    %223 = arith.addf %221, %222 : vector<8x128xf32>
    %224 = vector.extract_strided_slice %223 {offsets = [0, 0], sizes = [8, 32], strides = [1, 1]} : vector<8x128xf32> to vector<8x32xf32>
    %225 = arith.negf %224 : vector<8x32xf32>
    %226 = math.exp %225 : vector<8x32xf32>
    %cst_56 = arith.constant 1.000000e+00 : f32
    %227 = vector.broadcast %cst_56 : f32 to vector<8x32xf32>
    %228 = arith.addf %227, %226 : vector<8x32xf32>
    %229 = arith.divf %227, %228 : vector<8x32xf32>
    %230 = vector.extract_strided_slice %223 {offsets = [0, 32], sizes = [8, 32], strides = [1, 1]} : vector<8x128xf32> to vector<8x32xf32>
    %231 = arith.negf %230 : vector<8x32xf32>
    %232 = math.exp %231 : vector<8x32xf32>
    %cst_57 = arith.constant 1.000000e+00 : f32
    %233 = vector.broadcast %cst_57 : f32 to vector<8x32xf32>
    %234 = arith.addf %233, %232 : vector<8x32xf32>
    %235 = arith.divf %233, %234 : vector<8x32xf32>
    %236 = vector.extract_strided_slice %223 {offsets = [0, 64], sizes = [8, 32], strides = [1, 1]} : vector<8x128xf32> to vector<8x32xf32>
    %237 = math.tanh %236 : vector<8x32xf32>
    %238 = vector.extract_strided_slice %223 {offsets = [0, 96], sizes = [8, 32], strides = [1, 1]} : vector<8x128xf32> to vector<8x32xf32>
    %239 = arith.negf %238 : vector<8x32xf32>
    %240 = math.exp %239 : vector<8x32xf32>
    %cst_58 = arith.constant 1.000000e+00 : f32
    %241 = vector.broadcast %cst_58 : f32 to vector<8x32xf32>
    %242 = arith.addf %241, %240 : vector<8x32xf32>
    %243 = arith.divf %241, %242 : vector<8x32xf32>
    %244 = arith.mulf %235, %212 : vector<8x32xf32>
    %245 = arith.mulf %229, %237 : vector<8x32xf32>
    %246 = arith.addf %244, %245 : vector<8x32xf32>
    %247 = math.tanh %246 : vector<8x32xf32>
    %248 = arith.mulf %243, %247 : vector<8x32xf32>
    %249 = arith.addi %6, %219 : i32
    %250 = arith.index_cast %249 : i32 to index
    %c0_59 = arith.constant 0 : index
    %251 = vector.load %arg11[%250, %c0_59] : memref<64x32xf32, #tpu.memory_space<vmem>>, vector<8x32xf32>
    tpu.vector_store %arg11[%250, %c0_59], %248 {strides = array<i32>} : memref<64x32xf32, #tpu.memory_space<vmem>>, vector<8x32xf32>,
    %c7_i32 = arith.constant 7 : i32
    %c8_i32_60 = arith.constant 8 : i32
    %252 = arith.muli %c7_i32, %c8_i32_60 : i32
    %253 = tpu.assume_multiple %252, 8 : i32
    %254 = arith.index_cast %253 : i32 to index
    %c0_61 = arith.constant 0 : index
    %255 = vector.load %arg12[%254, %c0_61] : memref<64x128xf32, #tpu.memory_space<vmem>>, vector<8x128xf32>
    %cst_62 = arith.constant dense<0.000000e+00> : vector<8x128xf32>
    %256 = tpu.matmul %248, %1, %cst_62 {dimension_numbers = #tpu.dot_dimension_numbers<[1], [0], [0], [1], [0, 0, 1, 1], [], []>} : vector<8x32xf32>, vector<32x128xf32>, vector<8x128xf32> -> vector<8x128xf32>
    %257 = arith.addf %255, %256 : vector<8x128xf32>
    %258 = vector.extract_strided_slice %257 {offsets = [0, 0], sizes = [8, 32], strides = [1, 1]} : vector<8x128xf32> to vector<8x32xf32>
    %259 = arith.negf %258 : vector<8x32xf32>
    %260 = math.exp %259 : vector<8x32xf32>
    %cst_63 = arith.constant 1.000000e+00 : f32
    %261 = vector.broadcast %cst_63 : f32 to vector<8x32xf32>
    %262 = arith.addf %261, %260 : vector<8x32xf32>
    %263 = arith.divf %261, %262 : vector<8x32xf32>
    %264 = vector.extract_strided_slice %257 {offsets = [0, 32], sizes = [8, 32], strides = [1, 1]} : vector<8x128xf32> to vector<8x32xf32>
    %265 = arith.negf %264 : vector<8x32xf32>
    %266 = math.exp %265 : vector<8x32xf32>
    %cst_64 = arith.constant 1.000000e+00 : f32
    %267 = vector.broadcast %cst_64 : f32 to vector<8x32xf32>
    %268 = arith.addf %267, %266 : vector<8x32xf32>
    %269 = arith.divf %267, %268 : vector<8x32xf32>
    %270 = vector.extract_strided_slice %257 {offsets = [0, 64], sizes = [8, 32], strides = [1, 1]} : vector<8x128xf32> to vector<8x32xf32>
    %271 = math.tanh %270 : vector<8x32xf32>
    %272 = vector.extract_strided_slice %257 {offsets = [0, 96], sizes = [8, 32], strides = [1, 1]} : vector<8x128xf32> to vector<8x32xf32>
    %273 = arith.negf %272 : vector<8x32xf32>
    %274 = math.exp %273 : vector<8x32xf32>
    %cst_65 = arith.constant 1.000000e+00 : f32
    %275 = vector.broadcast %cst_65 : f32 to vector<8x32xf32>
    %276 = arith.addf %275, %274 : vector<8x32xf32>
    %277 = arith.divf %275, %276 : vector<8x32xf32>
    %278 = arith.mulf %269, %246 : vector<8x32xf32>
    %279 = arith.mulf %263, %271 : vector<8x32xf32>
    %280 = arith.addf %278, %279 : vector<8x32xf32>
    %281 = math.tanh %280 : vector<8x32xf32>
    %282 = arith.mulf %277, %281 : vector<8x32xf32>
    %283 = arith.addi %6, %253 : i32
    %284 = arith.index_cast %283 : i32 to index
    %c0_66 = arith.constant 0 : index
    %285 = vector.load %arg11[%284, %c0_66] : memref<64x32xf32, #tpu.memory_space<vmem>>, vector<8x32xf32>
    tpu.vector_store %arg11[%284, %c0_66], %282 {strides = array<i32>} : memref<64x32xf32, #tpu.memory_space<vmem>>, vector<8x32xf32>,
    %c8_i32_67 = arith.constant 8 : i32
    %c1_i32_68 = arith.constant 1 : i32
    %c0_69 = arith.constant 0 : index
    %c0_70 = arith.constant 0 : index
    %c0_71 = arith.constant 0 : index
    %286 = vector.load %arg5[%c0_69, %c0_70, %c0_71] : memref<1x32x128xf32, #tpu.memory_space<vmem>>, vector<1x32x128xf32>
    %287 = vector.shape_cast %286 : vector<1x32x128xf32> to vector<32x128xf32>
    %c0_72 = arith.constant 0 : index
    %c0_73 = arith.constant 0 : index
    %c0_74 = arith.constant 0 : index
    %288 = vector.load %arg6[%c0_72, %c0_73, %c0_74] : memref<1x32x128xf32, #tpu.memory_space<vmem>>, vector<1x32x128xf32>
    %289 = vector.shape_cast %288 : vector<1x32x128xf32> to vector<32x128xf32>
    %c0_75 = arith.constant 0 : index
    %c0_76 = arith.constant 0 : index
    %c0_77 = arith.constant 0 : index
    %290 = vector.load %arg7[%c0_75, %c0_76, %c0_77] : memref<1x1x128xf32, #tpu.memory_space<vmem>>, vector<1x1x128xf32>
    %291 = vector.shape_cast %290 : vector<1x1x128xf32> to vector<1x128xf32>
    %cst_78 = arith.constant 0.000000e+00 : f32
    %292 = vector.broadcast %cst_78 : f32 to vector<8x32xf32>
    %cst_79 = arith.constant 0.000000e+00 : f32
    %293 = vector.broadcast %cst_79 : f32 to vector<8x32xf32>
    %c0_i32_80 = arith.constant 0 : i32
    %c64_i32_81 = arith.constant 64 : i32
    %294 = arith.muli %c0_i32_80, %c64_i32_81 : i32
    %295 = tpu.assume_multiple %294, 64 : i32
    %296 = arith.index_cast %295 : i32 to index
    %c0_82 = arith.constant 0 : index
    %297 = vector.load %arg11[%296, %c0_82] : memref<64x32xf32, #tpu.memory_space<vmem>>, vector<64x32xf32>
    %cst_83 = arith.constant dense<0.000000e+00> : vector<64x128xf32>
    %298 = tpu.matmul %297, %287, %cst_83 {dimension_numbers = #tpu.dot_dimension_numbers<[1], [0], [0], [1], [0, 0, 1, 1], [], []>} : vector<64x32xf32>, vector<32x128xf32>, vector<64x128xf32> -> vector<64x128xf32>
    %299 = vector.broadcast %291 : vector<1x128xf32> to vector<64x128xf32>
    %300 = arith.addf %298, %299 : vector<64x128xf32>
    %c0_84 = arith.constant 0 : index
    %c0_85 = arith.constant 0 : index
    %301 = vector.load %arg12[%c0_84, %c0_85] : memref<64x128xf32, #tpu.memory_space<vmem>>, vector<64x128xf32>
    tpu.vector_store %arg12[%c0_84, %c0_85], %300 {strides = array<i32>} : memref<64x128xf32, #tpu.memory_space<vmem>>, vector<64x128xf32>,
    %c0_i32_86 = arith.constant 0 : i32
    %c8_i32_87 = arith.constant 8 : i32
    %302 = arith.muli %c0_i32_86, %c8_i32_87 : i32
    %303 = tpu.assume_multiple %302, 8 : i32
    %304 = arith.index_cast %303 : i32 to index
    %c0_88 = arith.constant 0 : index
    %305 = vector.load %arg12[%304, %c0_88] : memref<64x128xf32, #tpu.memory_space<vmem>>, vector<8x128xf32>
    %cst_89 = arith.constant dense<0.000000e+00> : vector<8x128xf32>
    %306 = tpu.matmul %292, %289, %cst_89 {dimension_numbers = #tpu.dot_dimension_numbers<[1], [0], [0], [1], [0, 0, 1, 1], [], []>} : vector<8x32xf32>, vector<32x128xf32>, vector<8x128xf32> -> vector<8x128xf32>
    %307 = arith.addf %305, %306 : vector<8x128xf32>
    %308 = vector.extract_strided_slice %307 {offsets = [0, 0], sizes = [8, 32], strides = [1, 1]} : vector<8x128xf32> to vector<8x32xf32>
    %309 = arith.negf %308 : vector<8x32xf32>
    %310 = math.exp %309 : vector<8x32xf32>
    %cst_90 = arith.constant 1.000000e+00 : f32
    %311 = vector.broadcast %cst_90 : f32 to vector<8x32xf32>
    %312 = arith.addf %311, %310 : vector<8x32xf32>
    %313 = arith.divf %311, %312 : vector<8x32xf32>
    %314 = vector.extract_strided_slice %307 {offsets = [0, 32], sizes = [8, 32], strides = [1, 1]} : vector<8x128xf32> to vector<8x32xf32>
    %315 = arith.negf %314 : vector<8x32xf32>
    %316 = math.exp %315 : vector<8x32xf32>
    %cst_91 = arith.constant 1.000000e+00 : f32
    %317 = vector.broadcast %cst_91 : f32 to vector<8x32xf32>
    %318 = arith.addf %317, %316 : vector<8x32xf32>
    %319 = arith.divf %317, %318 : vector<8x32xf32>
    %320 = vector.extract_strided_slice %307 {offsets = [0, 64], sizes = [8, 32], strides = [1, 1]} : vector<8x128xf32> to vector<8x32xf32>
    %321 = math.tanh %320 : vector<8x32xf32>
    %322 = vector.extract_strided_slice %307 {offsets = [0, 96], sizes = [8, 32], strides = [1, 1]} : vector<8x128xf32> to vector<8x32xf32>
    %323 = arith.negf %322 : vector<8x32xf32>
    %324 = math.exp %323 : vector<8x32xf32>
    %cst_92 = arith.constant 1.000000e+00 : f32
    %325 = vector.broadcast %cst_92 : f32 to vector<8x32xf32>
    %326 = arith.addf %325, %324 : vector<8x32xf32>
    %327 = arith.divf %325, %326 : vector<8x32xf32>
    %328 = arith.mulf %319, %293 : vector<8x32xf32>
    %329 = arith.mulf %313, %321 : vector<8x32xf32>
    %330 = arith.addf %328, %329 : vector<8x32xf32>
    %331 = math.tanh %330 : vector<8x32xf32>
    %332 = arith.mulf %327, %331 : vector<8x32xf32>
    %c1_i32_93 = arith.constant 1 : i32
    %c8_i32_94 = arith.constant 8 : i32
    %333 = arith.muli %c1_i32_93, %c8_i32_94 : i32
    %334 = tpu.assume_multiple %333, 8 : i32
    %335 = arith.index_cast %334 : i32 to index
    %c0_95 = arith.constant 0 : index
    %336 = vector.load %arg12[%335, %c0_95] : memref<64x128xf32, #tpu.memory_space<vmem>>, vector<8x128xf32>
    %cst_96 = arith.constant dense<0.000000e+00> : vector<8x128xf32>
    %337 = tpu.matmul %332, %289, %cst_96 {dimension_numbers = #tpu.dot_dimension_numbers<[1], [0], [0], [1], [0, 0, 1, 1], [], []>} : vector<8x32xf32>, vector<32x128xf32>, vector<8x128xf32> -> vector<8x128xf32>
    %338 = arith.addf %336, %337 : vector<8x128xf32>
    %339 = vector.extract_strided_slice %338 {offsets = [0, 0], sizes = [8, 32], strides = [1, 1]} : vector<8x128xf32> to vector<8x32xf32>
    %340 = arith.negf %339 : vector<8x32xf32>
    %341 = math.exp %340 : vector<8x32xf32>
    %cst_97 = arith.constant 1.000000e+00 : f32
    %342 = vector.broadcast %cst_97 : f32 to vector<8x32xf32>
    %343 = arith.addf %342, %341 : vector<8x32xf32>
    %344 = arith.divf %342, %343 : vector<8x32xf32>
    %345 = vector.extract_strided_slice %338 {offsets = [0, 32], sizes = [8, 32], strides = [1, 1]} : vector<8x128xf32> to vector<8x32xf32>
    %346 = arith.negf %345 : vector<8x32xf32>
    %347 = math.exp %346 : vector<8x32xf32>
    %cst_98 = arith.constant 1.000000e+00 : f32
    %348 = vector.broadcast %cst_98 : f32 to vector<8x32xf32>
    %349 = arith.addf %348, %347 : vector<8x32xf32>
    %350 = arith.divf %348, %349 : vector<8x32xf32>
    %351 = vector.extract_strided_slice %338 {offsets = [0, 64], sizes = [8, 32], strides = [1, 1]} : vector<8x128xf32> to vector<8x32xf32>
    %352 = math.tanh %351 : vector<8x32xf32>
    %353 = vector.extract_strided_slice %338 {offsets = [0, 96], sizes = [8, 32], strides = [1, 1]} : vector<8x128xf32> to vector<8x32xf32>
    %354 = arith.negf %353 : vector<8x32xf32>
    %355 = math.exp %354 : vector<8x32xf32>
    %cst_99 = arith.constant 1.000000e+00 : f32
    %356 = vector.broadcast %cst_99 : f32 to vector<8x32xf32>
    %357 = arith.addf %356, %355 : vector<8x32xf32>
    %358 = arith.divf %356, %357 : vector<8x32xf32>
    %359 = arith.mulf %350, %330 : vector<8x32xf32>
    %360 = arith.mulf %344, %352 : vector<8x32xf32>
    %361 = arith.addf %359, %360 : vector<8x32xf32>
    %362 = math.tanh %361 : vector<8x32xf32>
    %363 = arith.mulf %358, %362 : vector<8x32xf32>
    %c2_i32_100 = arith.constant 2 : i32
    %c8_i32_101 = arith.constant 8 : i32
    %364 = arith.muli %c2_i32_100, %c8_i32_101 : i32
    %365 = tpu.assume_multiple %364, 8 : i32
    %366 = arith.index_cast %365 : i32 to index
    %c0_102 = arith.constant 0 : index
    %367 = vector.load %arg12[%366, %c0_102] : memref<64x128xf32, #tpu.memory_space<vmem>>, vector<8x128xf32>
    %cst_103 = arith.constant dense<0.000000e+00> : vector<8x128xf32>
    %368 = tpu.matmul %363, %289, %cst_103 {dimension_numbers = #tpu.dot_dimension_numbers<[1], [0], [0], [1], [0, 0, 1, 1], [], []>} : vector<8x32xf32>, vector<32x128xf32>, vector<8x128xf32> -> vector<8x128xf32>
    %369 = arith.addf %367, %368 : vector<8x128xf32>
    %370 = vector.extract_strided_slice %369 {offsets = [0, 0], sizes = [8, 32], strides = [1, 1]} : vector<8x128xf32> to vector<8x32xf32>
    %371 = arith.negf %370 : vector<8x32xf32>
    %372 = math.exp %371 : vector<8x32xf32>
    %cst_104 = arith.constant 1.000000e+00 : f32
    %373 = vector.broadcast %cst_104 : f32 to vector<8x32xf32>
    %374 = arith.addf %373, %372 : vector<8x32xf32>
    %375 = arith.divf %373, %374 : vector<8x32xf32>
    %376 = vector.extract_strided_slice %369 {offsets = [0, 32], sizes = [8, 32], strides = [1, 1]} : vector<8x128xf32> to vector<8x32xf32>
    %377 = arith.negf %376 : vector<8x32xf32>
    %378 = math.exp %377 : vector<8x32xf32>
    %cst_105 = arith.constant 1.000000e+00 : f32
    %379 = vector.broadcast %cst_105 : f32 to vector<8x32xf32>
    %380 = arith.addf %379, %378 : vector<8x32xf32>
    %381 = arith.divf %379, %380 : vector<8x32xf32>
    %382 = vector.extract_strided_slice %369 {offsets = [0, 64], sizes = [8, 32], strides = [1, 1]} : vector<8x128xf32> to vector<8x32xf32>
    %383 = math.tanh %382 : vector<8x32xf32>
    %384 = vector.extract_strided_slice %369 {offsets = [0, 96], sizes = [8, 32], strides = [1, 1]} : vector<8x128xf32> to vector<8x32xf32>
    %385 = arith.negf %384 : vector<8x32xf32>
    %386 = math.exp %385 : vector<8x32xf32>
    %cst_106 = arith.constant 1.000000e+00 : f32
    %387 = vector.broadcast %cst_106 : f32 to vector<8x32xf32>
    %388 = arith.addf %387, %386 : vector<8x32xf32>
    %389 = arith.divf %387, %388 : vector<8x32xf32>
    %390 = arith.mulf %381, %361 : vector<8x32xf32>
    %391 = arith.mulf %375, %383 : vector<8x32xf32>
    %392 = arith.addf %390, %391 : vector<8x32xf32>
    %393 = math.tanh %392 : vector<8x32xf32>
    %394 = arith.mulf %389, %393 : vector<8x32xf32>
    %c3_i32_107 = arith.constant 3 : i32
    %c8_i32_108 = arith.constant 8 : i32
    %395 = arith.muli %c3_i32_107, %c8_i32_108 : i32
    %396 = tpu.assume_multiple %395, 8 : i32
    %397 = arith.index_cast %396 : i32 to index
    %c0_109 = arith.constant 0 : index
    %398 = vector.load %arg12[%397, %c0_109] : memref<64x128xf32, #tpu.memory_space<vmem>>, vector<8x128xf32>
    %cst_110 = arith.constant dense<0.000000e+00> : vector<8x128xf32>
    %399 = tpu.matmul %394, %289, %cst_110 {dimension_numbers = #tpu.dot_dimension_numbers<[1], [0], [0], [1], [0, 0, 1, 1], [], []>} : vector<8x32xf32>, vector<32x128xf32>, vector<8x128xf32> -> vector<8x128xf32>
    %400 = arith.addf %398, %399 : vector<8x128xf32>
    %401 = vector.extract_strided_slice %400 {offsets = [0, 0], sizes = [8, 32], strides = [1, 1]} : vector<8x128xf32> to vector<8x32xf32>
    %402 = arith.negf %401 : vector<8x32xf32>
    %403 = math.exp %402 : vector<8x32xf32>
    %cst_111 = arith.constant 1.000000e+00 : f32
    %404 = vector.broadcast %cst_111 : f32 to vector<8x32xf32>
    %405 = arith.addf %404, %403 : vector<8x32xf32>
    %406 = arith.divf %404, %405 : vector<8x32xf32>
    %407 = vector.extract_strided_slice %400 {offsets = [0, 32], sizes = [8, 32], strides = [1, 1]} : vector<8x128xf32> to vector<8x32xf32>
    %408 = arith.negf %407 : vector<8x32xf32>
    %409 = math.exp %408 : vector<8x32xf32>
    %cst_112 = arith.constant 1.000000e+00 : f32
    %410 = vector.broadcast %cst_112 : f32 to vector<8x32xf32>
    %411 = arith.addf %410, %409 : vector<8x32xf32>
    %412 = arith.divf %410, %411 : vector<8x32xf32>
    %413 = vector.extract_strided_slice %400 {offsets = [0, 64], sizes = [8, 32], strides = [1, 1]} : vector<8x128xf32> to vector<8x32xf32>
    %414 = math.tanh %413 : vector<8x32xf32>
    %415 = vector.extract_strided_slice %400 {offsets = [0, 96], sizes = [8, 32], strides = [1, 1]} : vector<8x128xf32> to vector<8x32xf32>
    %416 = arith.negf %415 : vector<8x32xf32>
    %417 = math.exp %416 : vector<8x32xf32>
    %cst_113 = arith.constant 1.000000e+00 : f32
    %418 = vector.broadcast %cst_113 : f32 to vector<8x32xf32>
    %419 = arith.addf %418, %417 : vector<8x32xf32>
    %420 = arith.divf %418, %419 : vector<8x32xf32>
    %421 = arith.mulf %412, %392 : vector<8x32xf32>
    %422 = arith.mulf %406, %414 : vector<8x32xf32>
    %423 = arith.addf %421, %422 : vector<8x32xf32>
    %424 = math.tanh %423 : vector<8x32xf32>
    %425 = arith.mulf %420, %424 : vector<8x32xf32>
    %c4_i32_114 = arith.constant 4 : i32
    %c8_i32_115 = arith.constant 8 : i32
    %426 = arith.muli %c4_i32_114, %c8_i32_115 : i32
    %427 = tpu.assume_multiple %426, 8 : i32
    %428 = arith.index_cast %427 : i32 to index
    %c0_116 = arith.constant 0 : index
    %429 = vector.load %arg12[%428, %c0_116] : memref<64x128xf32, #tpu.memory_space<vmem>>, vector<8x128xf32>
    %cst_117 = arith.constant dense<0.000000e+00> : vector<8x128xf32>
    %430 = tpu.matmul %425, %289, %cst_117 {dimension_numbers = #tpu.dot_dimension_numbers<[1], [0], [0], [1], [0, 0, 1, 1], [], []>} : vector<8x32xf32>, vector<32x128xf32>, vector<8x128xf32> -> vector<8x128xf32>
    %431 = arith.addf %429, %430 : vector<8x128xf32>
    %432 = vector.extract_strided_slice %431 {offsets = [0, 0], sizes = [8, 32], strides = [1, 1]} : vector<8x128xf32> to vector<8x32xf32>
    %433 = arith.negf %432 : vector<8x32xf32>
    %434 = math.exp %433 : vector<8x32xf32>
    %cst_118 = arith.constant 1.000000e+00 : f32
    %435 = vector.broadcast %cst_118 : f32 to vector<8x32xf32>
    %436 = arith.addf %435, %434 : vector<8x32xf32>
    %437 = arith.divf %435, %436 : vector<8x32xf32>
    %438 = vector.extract_strided_slice %431 {offsets = [0, 32], sizes = [8, 32], strides = [1, 1]} : vector<8x128xf32> to vector<8x32xf32>
    %439 = arith.negf %438 : vector<8x32xf32>
    %440 = math.exp %439 : vector<8x32xf32>
    %cst_119 = arith.constant 1.000000e+00 : f32
    %441 = vector.broadcast %cst_119 : f32 to vector<8x32xf32>
    %442 = arith.addf %441, %440 : vector<8x32xf32>
    %443 = arith.divf %441, %442 : vector<8x32xf32>
    %444 = vector.extract_strided_slice %431 {offsets = [0, 64], sizes = [8, 32], strides = [1, 1]} : vector<8x128xf32> to vector<8x32xf32>
    %445 = math.tanh %444 : vector<8x32xf32>
    %446 = vector.extract_strided_slice %431 {offsets = [0, 96], sizes = [8, 32], strides = [1, 1]} : vector<8x128xf32> to vector<8x32xf32>
    %447 = arith.negf %446 : vector<8x32xf32>
    %448 = math.exp %447 : vector<8x32xf32>
    %cst_120 = arith.constant 1.000000e+00 : f32
    %449 = vector.broadcast %cst_120 : f32 to vector<8x32xf32>
    %450 = arith.addf %449, %448 : vector<8x32xf32>
    %451 = arith.divf %449, %450 : vector<8x32xf32>
    %452 = arith.mulf %443, %423 : vector<8x32xf32>
    %453 = arith.mulf %437, %445 : vector<8x32xf32>
    %454 = arith.addf %452, %453 : vector<8x32xf32>
    %455 = math.tanh %454 : vector<8x32xf32>
    %456 = arith.mulf %451, %455 : vector<8x32xf32>
    %c5_i32_121 = arith.constant 5 : i32
    %c8_i32_122 = arith.constant 8 : i32
    %457 = arith.muli %c5_i32_121, %c8_i32_122 : i32
    %458 = tpu.assume_multiple %457, 8 : i32
    %459 = arith.index_cast %458 : i32 to index
    %c0_123 = arith.constant 0 : index
    %460 = vector.load %arg12[%459, %c0_123] : memref<64x128xf32, #tpu.memory_space<vmem>>, vector<8x128xf32>
    %cst_124 = arith.constant dense<0.000000e+00> : vector<8x128xf32>
    %461 = tpu.matmul %456, %289, %cst_124 {dimension_numbers = #tpu.dot_dimension_numbers<[1], [0], [0], [1], [0, 0, 1, 1], [], []>} : vector<8x32xf32>, vector<32x128xf32>, vector<8x128xf32> -> vector<8x128xf32>
    %462 = arith.addf %460, %461 : vector<8x128xf32>
    %463 = vector.extract_strided_slice %462 {offsets = [0, 0], sizes = [8, 32], strides = [1, 1]} : vector<8x128xf32> to vector<8x32xf32>
    %464 = arith.negf %463 : vector<8x32xf32>
    %465 = math.exp %464 : vector<8x32xf32>
    %cst_125 = arith.constant 1.000000e+00 : f32
    %466 = vector.broadcast %cst_125 : f32 to vector<8x32xf32>
    %467 = arith.addf %466, %465 : vector<8x32xf32>
    %468 = arith.divf %466, %467 : vector<8x32xf32>
    %469 = vector.extract_strided_slice %462 {offsets = [0, 32], sizes = [8, 32], strides = [1, 1]} : vector<8x128xf32> to vector<8x32xf32>
    %470 = arith.negf %469 : vector<8x32xf32>
    %471 = math.exp %470 : vector<8x32xf32>
    %cst_126 = arith.constant 1.000000e+00 : f32
    %472 = vector.broadcast %cst_126 : f32 to vector<8x32xf32>
    %473 = arith.addf %472, %471 : vector<8x32xf32>
    %474 = arith.divf %472, %473 : vector<8x32xf32>
    %475 = vector.extract_strided_slice %462 {offsets = [0, 64], sizes = [8, 32], strides = [1, 1]} : vector<8x128xf32> to vector<8x32xf32>
    %476 = math.tanh %475 : vector<8x32xf32>
    %477 = vector.extract_strided_slice %462 {offsets = [0, 96], sizes = [8, 32], strides = [1, 1]} : vector<8x128xf32> to vector<8x32xf32>
    %478 = arith.negf %477 : vector<8x32xf32>
    %479 = math.exp %478 : vector<8x32xf32>
    %cst_127 = arith.constant 1.000000e+00 : f32
    %480 = vector.broadcast %cst_127 : f32 to vector<8x32xf32>
    %481 = arith.addf %480, %479 : vector<8x32xf32>
    %482 = arith.divf %480, %481 : vector<8x32xf32>
    %483 = arith.mulf %474, %454 : vector<8x32xf32>
    %484 = arith.mulf %468, %476 : vector<8x32xf32>
    %485 = arith.addf %483, %484 : vector<8x32xf32>
    %486 = math.tanh %485 : vector<8x32xf32>
    %487 = arith.mulf %482, %486 : vector<8x32xf32>
    %c6_i32_128 = arith.constant 6 : i32
    %c8_i32_129 = arith.constant 8 : i32
    %488 = arith.muli %c6_i32_128, %c8_i32_129 : i32
    %489 = tpu.assume_multiple %488, 8 : i32
    %490 = arith.index_cast %489 : i32 to index
    %c0_130 = arith.constant 0 : index
    %491 = vector.load %arg12[%490, %c0_130] : memref<64x128xf32, #tpu.memory_space<vmem>>, vector<8x128xf32>
    %cst_131 = arith.constant dense<0.000000e+00> : vector<8x128xf32>
    %492 = tpu.matmul %487, %289, %cst_131 {dimension_numbers = #tpu.dot_dimension_numbers<[1], [0], [0], [1], [0, 0, 1, 1], [], []>} : vector<8x32xf32>, vector<32x128xf32>, vector<8x128xf32> -> vector<8x128xf32>
    %493 = arith.addf %491, %492 : vector<8x128xf32>
    %494 = vector.extract_strided_slice %493 {offsets = [0, 0], sizes = [8, 32], strides = [1, 1]} : vector<8x128xf32> to vector<8x32xf32>
    %495 = arith.negf %494 : vector<8x32xf32>
    %496 = math.exp %495 : vector<8x32xf32>
    %cst_132 = arith.constant 1.000000e+00 : f32
    %497 = vector.broadcast %cst_132 : f32 to vector<8x32xf32>
    %498 = arith.addf %497, %496 : vector<8x32xf32>
    %499 = arith.divf %497, %498 : vector<8x32xf32>
    %500 = vector.extract_strided_slice %493 {offsets = [0, 32], sizes = [8, 32], strides = [1, 1]} : vector<8x128xf32> to vector<8x32xf32>
    %501 = arith.negf %500 : vector<8x32xf32>
    %502 = math.exp %501 : vector<8x32xf32>
    %cst_133 = arith.constant 1.000000e+00 : f32
    %503 = vector.broadcast %cst_133 : f32 to vector<8x32xf32>
    %504 = arith.addf %503, %502 : vector<8x32xf32>
    %505 = arith.divf %503, %504 : vector<8x32xf32>
    %506 = vector.extract_strided_slice %493 {offsets = [0, 64], sizes = [8, 32], strides = [1, 1]} : vector<8x128xf32> to vector<8x32xf32>
    %507 = math.tanh %506 : vector<8x32xf32>
    %508 = vector.extract_strided_slice %493 {offsets = [0, 96], sizes = [8, 32], strides = [1, 1]} : vector<8x128xf32> to vector<8x32xf32>
    %509 = arith.negf %508 : vector<8x32xf32>
    %510 = math.exp %509 : vector<8x32xf32>
    %cst_134 = arith.constant 1.000000e+00 : f32
    %511 = vector.broadcast %cst_134 : f32 to vector<8x32xf32>
    %512 = arith.addf %511, %510 : vector<8x32xf32>
    %513 = arith.divf %511, %512 : vector<8x32xf32>
    %514 = arith.mulf %505, %485 : vector<8x32xf32>
    %515 = arith.mulf %499, %507 : vector<8x32xf32>
    %516 = arith.addf %514, %515 : vector<8x32xf32>
    %517 = math.tanh %516 : vector<8x32xf32>
    %518 = arith.mulf %513, %517 : vector<8x32xf32>
    %c7_i32_135 = arith.constant 7 : i32
    %c8_i32_136 = arith.constant 8 : i32
    %519 = arith.muli %c7_i32_135, %c8_i32_136 : i32
    %520 = tpu.assume_multiple %519, 8 : i32
    %521 = arith.index_cast %520 : i32 to index
    %c0_137 = arith.constant 0 : index
    %522 = vector.load %arg12[%521, %c0_137] : memref<64x128xf32, #tpu.memory_space<vmem>>, vector<8x128xf32>
    %cst_138 = arith.constant dense<0.000000e+00> : vector<8x128xf32>
    %523 = tpu.matmul %518, %289, %cst_138 {dimension_numbers = #tpu.dot_dimension_numbers<[1], [0], [0], [1], [0, 0, 1, 1], [], []>} : vector<8x32xf32>, vector<32x128xf32>, vector<8x128xf32> -> vector<8x128xf32>
    %524 = arith.addf %522, %523 : vector<8x128xf32>
    %525 = vector.extract_strided_slice %524 {offsets = [0, 0], sizes = [8, 32], strides = [1, 1]} : vector<8x128xf32> to vector<8x32xf32>
    %526 = arith.negf %525 : vector<8x32xf32>
    %527 = math.exp %526 : vector<8x32xf32>
    %cst_139 = arith.constant 1.000000e+00 : f32
    %528 = vector.broadcast %cst_139 : f32 to vector<8x32xf32>
    %529 = arith.addf %528, %527 : vector<8x32xf32>
    %530 = arith.divf %528, %529 : vector<8x32xf32>
    %531 = vector.extract_strided_slice %524 {offsets = [0, 32], sizes = [8, 32], strides = [1, 1]} : vector<8x128xf32> to vector<8x32xf32>
    %532 = arith.negf %531 : vector<8x32xf32>
    %533 = math.exp %532 : vector<8x32xf32>
    %cst_140 = arith.constant 1.000000e+00 : f32
    %534 = vector.broadcast %cst_140 : f32 to vector<8x32xf32>
    %535 = arith.addf %534, %533 : vector<8x32xf32>
    %536 = arith.divf %534, %535 : vector<8x32xf32>
    %537 = vector.extract_strided_slice %524 {offsets = [0, 64], sizes = [8, 32], strides = [1, 1]} : vector<8x128xf32> to vector<8x32xf32>
    %538 = math.tanh %537 : vector<8x32xf32>
    %539 = vector.extract_strided_slice %524 {offsets = [0, 96], sizes = [8, 32], strides = [1, 1]} : vector<8x128xf32> to vector<8x32xf32>
    %540 = arith.negf %539 : vector<8x32xf32>
    %541 = math.exp %540 : vector<8x32xf32>
    %cst_141 = arith.constant 1.000000e+00 : f32
    %542 = vector.broadcast %cst_141 : f32 to vector<8x32xf32>
    %543 = arith.addf %542, %541 : vector<8x32xf32>
    %544 = arith.divf %542, %543 : vector<8x32xf32>
    %545 = arith.mulf %536, %516 : vector<8x32xf32>
    %546 = arith.mulf %530, %538 : vector<8x32xf32>
    %547 = arith.addf %545, %546 : vector<8x32xf32>
    %548 = math.tanh %547 : vector<8x32xf32>
    %549 = arith.mulf %544, %548 : vector<8x32xf32>
    %c8_i32_142 = arith.constant 8 : i32
    %c1_i32_143 = arith.constant 1 : i32
    %c0_144 = arith.constant 0 : index
    %c0_145 = arith.constant 0 : index
    %550 = vector.load %arg8[%c0_144, %c0_145] : memref<32x10xf32, #tpu.memory_space<vmem>>, vector<32x10xf32>
    %cst_146 = arith.constant dense<0.000000e+00> : vector<8x10xf32>
    %551 = tpu.matmul %549, %550, %cst_146 {dimension_numbers = #tpu.dot_dimension_numbers<[1], [0], [0], [1], [0, 0, 1, 1], [], []>} : vector<8x32xf32>, vector<32x10xf32>, vector<8x10xf32> -> vector<8x10xf32>
    %c0_147 = arith.constant 0 : index
    %c0_148 = arith.constant 0 : index
    %552 = vector.load %arg9[%c0_147, %c0_148] : memref<1x10xf32, #tpu.memory_space<vmem>>, vector<1x10xf32>
    %553 = vector.broadcast %552 : vector<1x10xf32> to vector<8x10xf32>
    %554 = arith.addf %551, %553 : vector<8x10xf32>
    %c0_149 = arith.constant 0 : index
    %c0_150 = arith.constant 0 : index
    %555 = vector.load %arg10[%c0_149, %c0_150] : memref<8x10xf32, #tpu.memory_space<vmem>>, vector<8x10xf32>
    tpu.vector_store %arg10[%c0_149, %c0_150], %554 {strides = array<i32>} : memref<8x10xf32, #tpu.memory_space<vmem>>, vector<8x10xf32>,
    return
  }
  func.func @transform_0(%arg0: i32) -> (i32, i32, i32) {
    %c0_i32 = arith.constant 0 : i32
    %c0_i32_0 = arith.constant 0 : i32
    %c0_i32_1 = arith.constant 0 : i32
    return %arg0, %c0_i32, %c0_i32_0 : i32, i32, i32
  }
  func.func @transform_1(%arg0: i32) -> (i32, i32) {
    %c0_i32 = arith.constant 0 : i32
    %c0_i32_0 = arith.constant 0 : i32
    %c0_i32_1 = arith.constant 0 : i32
    return %c0_i32, %c0_i32_0 : i32, i32
  }
  func.func @transform_2(%arg0: i32) -> (i32, i32) {
    %c0_i32 = arith.constant 0 : i32
    %c0_i32_0 = arith.constant 0 : i32
    %c0_i32_1 = arith.constant 0 : i32
    return %c0_i32, %c0_i32_0 : i32, i32
  }
  func.func @transform_3(%arg0: i32) -> (i32, i32) {
    %c0_i32 = arith.constant 0 : i32
    %c0_i32_0 = arith.constant 0 : i32
    %c0_i32_1 = arith.constant 0 : i32
    return %c0_i32, %c0_i32_0 : i32, i32
  }
  func.func @transform_4(%arg0: i32) -> (i32, i32, i32) {
    %c0_i32 = arith.constant 0 : i32
    %c0_i32_0 = arith.constant 0 : i32
    %c0_i32_1 = arith.constant 0 : i32
    %c0_i32_2 = arith.constant 0 : i32
    return %c0_i32, %c0_i32_0, %c0_i32_1 : i32, i32, i32
  }
  func.func @transform_5(%arg0: i32) -> (i32, i32, i32) {
    %c0_i32 = arith.constant 0 : i32
    %c0_i32_0 = arith.constant 0 : i32
    %c0_i32_1 = arith.constant 0 : i32
    %c0_i32_2 = arith.constant 0 : i32
    return %c0_i32, %c0_i32_0, %c0_i32_1 : i32, i32, i32
  }
  func.func @transform_6(%arg0: i32) -> (i32, i32, i32) {
    %c0_i32 = arith.constant 0 : i32
    %c0_i32_0 = arith.constant 0 : i32
    %c0_i32_1 = arith.constant 0 : i32
    %c0_i32_2 = arith.constant 0 : i32
    return %c0_i32, %c0_i32_0, %c0_i32_1 : i32, i32, i32
  }
  func.func @transform_7(%arg0: i32) -> (i32, i32) {
    %c0_i32 = arith.constant 0 : i32
    %c0_i32_0 = arith.constant 0 : i32
    %c0_i32_1 = arith.constant 0 : i32
    return %c0_i32, %c0_i32_0 : i32, i32
  }
  func.func @transform_8(%arg0: i32) -> (i32, i32) {
    %c0_i32 = arith.constant 0 : i32
    %c0_i32_0 = arith.constant 0 : i32
    %c0_i32_1 = arith.constant 0 : i32
    return %c0_i32, %c0_i32_0 : i32, i32
  }
  func.func @transform_9(%arg0: i32) -> (i32, i32) {
    %c0_i32 = arith.constant 0 : i32
    %c0_i32_0 = arith.constant 0 : i32
    return %arg0, %c0_i32 : i32, i32
  }
}

</mosaic_0001>

<llo_original>
// kernel: lstm_speech_classifier_forward.1
$region0: #{lstm_speech_classifier_forward.1}
  #allocation0 [shape = 'u32[]', space=smem, size = 0x4, offset = 0x4, fixed_abs, tag = 'smem constant byte address 0x4 - core index']
  #allocation1 [shape = 'u32[72,128]{1,0:T(1,128)}', space=vmem, size = 0x9000, scoped, tag = 'internal scratch']
  #allocation2 [shape = 'f32[64,32]{1,0:T(8,128)}', space=vmem, size = 0x8000, scoped, tag = 'scratch operand']
  #allocation3 [shape = 'f32[64,128]{1,0:T(8,128)}', space=vmem, size = 0x8000, scoped, tag = 'scratch operand']
  %s0 = inlined_call_operand.vmem [shape: f32[1,64,16], index: 0, kind: input, shape index: {}]
  %s1 = inlined_call_operand.vmem [shape: f32[16,128], index: 1, kind: input, shape index: {}]
  %s2 = inlined_call_operand.vmem [shape: f32[32,128], index: 2, kind: input, shape index: {}]
  %s3 = inlined_call_operand.vmem [shape: f32[1,128], index: 3, kind: input, shape index: {}]
  %s4 = inlined_call_operand.vmem [shape: f32[1,32,128], index: 4, kind: input, shape index: {}]
  %s5 = inlined_call_operand.vmem [shape: f32[1,32,128], index: 5, kind: input, shape index: {}]
  %s6 = inlined_call_operand.vmem [shape: f32[1,1,128], index: 6, kind: input, shape index: {}]
  %s7 = inlined_call_operand.vmem [shape: f32[32,10], index: 7, kind: input, shape index: {}]
  %s8 = inlined_call_operand.vmem [shape: f32[1,10], index: 8, kind: input, shape index: {}]
  %s9 = inlined_call_operand.vmem [shape: f32[8,10], index: 9, kind: output, shape index: {}]
  %s10 = sld [smem:[#allocation0]]
  $region46: #{lstm_speech_classifier_forward.1} parent=0
    _
  %s12 = ssub.s32 1, %s10
  %s13 = scalar_select 0, %s12, %s10
  // Predicated region
  $region2: #{lstm_speech_classifier_forward.1} parent=0 // pred_check
    _
  $region3: #{lstm_speech_classifier_forward.1} parent=0 // pred_check_branch
    %15 = sbr.rel (0) target = $region5
  $region4: #{lstm_speech_classifier_forward.1} parent=0 // pred_region
    _
  $region5: #{lstm_speech_classifier_forward.1} parent=0 // pred_fallthru
    _
  // Predicated region
  $region6: #{lstm_speech_classifier_forward.1} parent=0 // pred_check
    _
  $region7: #{lstm_speech_classifier_forward.1} parent=0 // pred_check_branch
    %17 = sbr.rel (0) target = $region9
  $region8: #{lstm_speech_classifier_forward.1} parent=0 // pred_region
    _
  $region9: #{lstm_speech_classifier_forward.1} parent=0 // pred_fallthru
    _
  // Predicated region
  $region10: #{lstm_speech_classifier_forward.1} parent=0 // pred_check
    _
  $region11: #{lstm_speech_classifier_forward.1} parent=0 // pred_check_branch
    %19 = sbr.rel (0) target = $region13
  $region12: #{lstm_speech_classifier_forward.1} parent=0 // pred_region
    _
  $region13: #{lstm_speech_classifier_forward.1} parent=0 // pred_fallthru
    _
  // Predicated region
  $region14: #{lstm_speech_classifier_forward.1} parent=0 // pred_check
    _
  $region15: #{lstm_speech_classifier_forward.1} parent=0 // pred_check_branch
    %21 = sbr.rel (0) target = $region17
  $region16: #{lstm_speech_classifier_forward.1} parent=0 // pred_region
    _
  $region17: #{lstm_speech_classifier_forward.1} parent=0 // pred_fallthru
    _
  // Predicated region
  $region18: #{lstm_speech_classifier_forward.1} parent=0 // pred_check
    _
  $region19: #{lstm_speech_classifier_forward.1} parent=0 // pred_check_branch
    %23 = sbr.rel (0) target = $region21
  $region20: #{lstm_speech_classifier_forward.1} parent=0 // pred_region
    _
  $region21: #{lstm_speech_classifier_forward.1} parent=0 // pred_fallthru
    _
  // Predicated region
  $region22: #{lstm_speech_classifier_forward.1} parent=0 // pred_check
    _
  $region23: #{lstm_speech_classifier_forward.1} parent=0 // pred_check_branch
    %25 = sbr.rel (0) target = $region25
  $region24: #{lstm_speech_classifier_forward.1} parent=0 // pred_region
    _
  $region25: #{lstm_speech_classifier_forward.1} parent=0 // pred_fallthru
    _
  // Predicated region
  $region26: #{lstm_speech_classifier_forward.1} parent=0 // pred_check
    _
  $region27: #{lstm_speech_classifier_forward.1} parent=0 // pred_check_branch
    %27 = sbr.rel (0) target = $region29
  $region28: #{lstm_speech_classifier_forward.1} parent=0 // pred_region
    _
  $region29: #{lstm_speech_classifier_forward.1} parent=0 // pred_fallthru
    _
  // Predicated region
  $region30: #{lstm_speech_classifier_forward.1} parent=0 // pred_check
    _
  $region31: #{lstm_speech_classifier_forward.1} parent=0 // pred_check_branch
    %29 = sbr.rel (0) target = $region33
  $region32: #{lstm_speech_classifier_forward.1} parent=0 // pred_region
    _
  $region33: #{lstm_speech_classifier_forward.1} parent=0 // pred_fallthru
    _
  // Predicated region
  $region34: #{lstm_speech_classifier_forward.1} parent=0 // pred_check
    _
  $region35: #{lstm_speech_classifier_forward.1} parent=0 // pred_check_branch
    %31 = sbr.rel (0) target = $region37
  $region36: #{lstm_speech_classifier_forward.1} parent=0 // pred_region
    _
  $region37: #{lstm_speech_classifier_forward.1} parent=0 // pred_fallthru
    _
  %v32 = vld [vmem:[%s1] sm:$0xff]
  %v33 = vld [vmem:[%s1 + $0x8] sm:$0xff]
  %v34 = vld [vmem:[%s2] sm:$0xff]
  %v35 = vld [vmem:[%s2 + $0x8] sm:$0xff]
  %v36 = vld [vmem:[%s2 + $0x10] sm:$0xff]
  %v37 = vld [vmem:[%s2 + $0x18] sm:$0xff]
  %v38 = vld [vmem:[%s3] sm:$0x1]
  %v39 = vld [vmem:[%s0] sm:$0xff]
  %v40 = vld [vmem:[%s0 + $0x8] sm:$0xff]
  %v41 = vld [vmem:[%s0 + $0x10] sm:$0xff]
  %v42 = vld [vmem:[%s0 + $0x18] sm:$0xff]
  %v43 = vld [vmem:[%s0 + $0x20] sm:$0xff]
  %v44 = vld [vmem:[%s0 + $0x28] sm:$0xff]
  %v45 = vld [vmem:[%s0 + $0x30] sm:$0xff]
  %v46 = vld [vmem:[%s0 + $0x38] sm:$0xff]
  %v48 = vperm.slane %v38, 0
  %vm50 = vcmask 130048
  %v52 = vsel %vm50, %v39, 0
  %v55 = vsel %vm50, %v40, 0
  %v58 = vsel %vm50, %v41, 0
  %v61 = vsel %vm50, %v42, 0
  %v64 = vsel %vm50, %v43, 0
  %v67 = vsel %vm50, %v44, 0
  %v70 = vsel %vm50, %v45, 0
  %v73 = vsel %vm50, %v46, 0
  %75 = vmatpush.msra.mxu0 0.0
  %76 = vmatpush.msra.mxu0 0.0
  %77 = vmatpush.msra.mxu0 0.0
  %78 = vmatpush.msra.mxu0 0.0
  %79 = vmatpush.msra.mxu0 0.0
  %80 = vmatpush.msra.mxu0 0.0
  %81 = vmatpush.msra.mxu0 0.0
  %82 = vmatpush.msra.mxu0 0.0
  %83 = vmatpush.msra.mxu0 0.0
  %84 = vmatpush.msra.mxu0 0.0
  %85 = vmatpush.msra.mxu0 0.0
  %86 = vmatpush.msra.mxu0 0.0
  %87 = vmatpush.msra.mxu0 0.0
  %88 = vmatpush.msra.mxu0 0.0
  %89 = vmatpush.msra.mxu0 %v33
  %90 = vmatpush.msra.mxu0 %v32
  %91 = vmatmul.f32.gmra.mxu0 %v52
  %v92 = vpop.f32.mrf.mxu0
  %v93 = vadd.f32 %v48, %v92
  %94 = vmatmul.f32.gmra.mxu0 %v55
  %v95 = vpop.f32.mrf.mxu0
  %v96 = vadd.f32 %v48, %v95
  %97 = vmatmul.f32.gmra.mxu0 %v58
  %v98 = vpop.f32.mrf.mxu0
  %v99 = vadd.f32 %v48, %v98
  %100 = vmatmul.f32.gmra.mxu0 %v61
  %v101 = vpop.f32.mrf.mxu0
  %v102 = vadd.f32 %v48, %v101
  %103 = vmatmul.f32.gmra.mxu0 %v64
  %v104 = vpop.f32.mrf.mxu0
  %v105 = vadd.f32 %v48, %v104
  %106 = vmatmul.f32.gmra.mxu0 %v67
  %v107 = vpop.f32.mrf.mxu0
  %v108 = vadd.f32 %v48, %v107
  %109 = vmatmul.f32.gmra.mxu0 %v70
  %v110 = vpop.f32.mrf.mxu0
  %v111 = vadd.f32 %v48, %v110
  %112 = vmatmul.f32.gmra.mxu0 %v73
  %v113 = vpop.f32.mrf.mxu0
  %v114 = vadd.f32 %v48, %v113
  %115 = vdwg.mxu0
  %116 = vst [vmem:[#allocation3] sm:$0xff] %v93
  %117 = vst [vmem:[#allocation3 + $0x8] sm:$0xff] %v96
  %118 = vst [vmem:[#allocation3 + $0x10] sm:$0xff] %v99
  %119 = vst [vmem:[#allocation3 + $0x18] sm:$0xff] %v102
  %120 = vst [vmem:[#allocation3 + $0x20] sm:$0xff] %v105
  %121 = vst [vmem:[#allocation3 + $0x28] sm:$0xff] %v108
  %122 = vst [vmem:[#allocation3 + $0x30] sm:$0xff] %v111
  %123 = vst [vmem:[#allocation3 + $0x38] sm:$0xff] %v114
  %v124 = vld [vmem:[#allocation3] sm:$0xff]
  %vm125 = vcmask 261120
  %v127 = vsel %vm125, 0.0, 0
  %129 = vmatpush.msra.mxu0 0.0
  %130 = vmatpush.msra.mxu0 0.0
  %131 = vmatpush.msra.mxu0 0.0
  %132 = vmatpush.msra.mxu0 0.0
  %133 = vmatpush.msra.mxu0 0.0
  %134 = vmatpush.msra.mxu0 0.0
  %135 = vmatpush.msra.mxu0 0.0
  %136 = vmatpush.msra.mxu0 0.0
  %137 = vmatpush.msra.mxu0 0.0
  %138 = vmatpush.msra.mxu0 0.0
  %139 = vmatpush.msra.mxu0 0.0
  %140 = vmatpush.msra.mxu0 0.0
  %141 = vmatpush.msra.mxu0 %v37
  %142 = vmatpush.msra.mxu0 %v36
  %143 = vmatpush.msra.mxu0 %v35
  %144 = vmatpush.msra.mxu0 %v34
  %145 = vmatmul.f32.gmra.mxu0 %v127
  %v146 = vpop.f32.mrf.mxu0
  %v147 = vadd.f32 0.0, %v146
  %148 = vdwg.mxu0
  %v149 = vadd.f32 %v124, %v147
  %v150 = vxor.u32 %v149, 2147483648
  %v151 = vmul.f32 %v150, 1.442695
  %v152 = vpow.pop %v151
  %v153 = vadd.f32 %v152, 1.0
  %v154 = vrcp.pop %v153
  %v155 = vmul.f32 %v153, %v154
  %v156 = vsub.f32 1.0, %v155
  %v157 = vmul.f32 %v154, %v156
  %v158 = vadd.f32 %v154, %v157
  %vm159 = vweird.f32 %v153
  %vm160 = vweird.f32 %v154
  %vm161 = vmor %vm159, %vm160
  %v162 = vsel %vm161, %v154, %v158
  %v163 = vand.u32 2147483647, %v153
  %vm164 = vcmp.eq.f32.partialorder %v163, 8.507059e+37
  %v165 = vand.u32 %v153, 2147483648
  %v166 = vor.u32 1.1754944e-38, %v165
  %v167 = vsel %vm164, %v166, %v162
  %v168 = vmul.f32 1.0, %v167
  %v169 = vtanh.pop %v149
  %v170 = vmul.f32 %v168, 0.0
  %172 = vrot.lane.b32.xlu0 %v169, 64
  %v173 = vpop.permute.xlu0 %172
  %v175 = vmul.f32 %v168, %v173
  %177 = vrot.lane.b32.xlu0 %v175, 32
  %v178 = vpop.permute.xlu0 %177
  %v180 = vadd.f32 %v170, %v178
  %v181 = vtanh.pop %v180
  %183 = vrot.lane.b32.xlu0 %v181, 64
  %v184 = vpop.permute.xlu0 %183
  %v186 = vmul.f32 %v168, %v184
  %s187 = sadd.s32 0, 0
  %189 = vrot.lane.b32.xlu0 %v186, 32
  %v190 = vpop.permute.xlu0 %189
  %s192 = scalar_lea.vmem [#allocation2], %s187
  %193 = vst.msk [vmem:[%s192] sm:$0xff] %vm125, %v190
  %s194 = scalar_lea.vmem [#allocation3], 8
  %v195 = vld [vmem:[%s194] sm:$0xff]
  %v196 = vsel %vm125, %v190, 0
  %198 = vmatpush.msra.mxu0 0.0
  %199 = vmatpush.msra.mxu0 0.0
  %200 = vmatpush.msra.mxu0 0.0
  %201 = vmatpush.msra.mxu0 0.0
  %202 = vmatpush.msra.mxu0 0.0
  %203 = vmatpush.msra.mxu0 0.0
  %204 = vmatpush.msra.mxu0 0.0
  %205 = vmatpush.msra.mxu0 0.0
  %206 = vmatpush.msra.mxu0 0.0
  %207 = vmatpush.msra.mxu0 0.0
  %208 = vmatpush.msra.mxu0 0.0
  %209 = vmatpush.msra.mxu0 0.0
  %210 = vmatpush.msra.mxu0 %v37
  %211 = vmatpush.msra.mxu0 %v36
  %212 = vmatpush.msra.mxu0 %v35
  %213 = vmatpush.msra.mxu0 %v34
  %214 = vmatmul.f32.gmra.mxu0 %v196
  %v215 = vpop.f32.mrf.mxu0
  %v216 = vadd.f32 0.0, %v215
  %217 = vdwg.mxu0
  %v218 = vadd.f32 %v195, %v216
  %v219 = vxor.u32 %v218, 2147483648
  %v220 = vmul.f32 %v219, 1.442695
  %v221 = vpow.pop %v220
  %v222 = vadd.f32 %v221, 1.0
  %v223 = vrcp.pop %v222
  %v224 = vmul.f32 %v222, %v223
  %v225 = vsub.f32 1.0, %v224
  %v226 = vmul.f32 %v223, %v225
  %v227 = vadd.f32 %v223, %v226
  %vm228 = vweird.f32 %v222
  %vm229 = vweird.f32 %v223
  %vm230 = vmor %vm228, %vm229
  %v231 = vsel %vm230, %v223, %v227
  %v232 = vand.u32 2147483647, %v222
  %vm233 = vcmp.eq.f32.partialorder %v232, 8.507059e+37
  %v234 = vand.u32 %v222, 2147483648
  %v235 = vor.u32 1.1754944e-38, %v234
  %v236 = vsel %vm233, %v235, %v231
  %v237 = vmul.f32 1.0, %v236
  %v238 = vtanh.pop %v218
  %v239 = vmul.f32 %v237, %v180
  %241 = vrot.lane.b32.xlu0 %v238, 64
  %v242 = vpop.permute.xlu0 %241
  %v244 = vmul.f32 %v237, %v242
  %246 = vrot.lane.b32.xlu0 %v244, 32
  %v247 = vpop.permute.xlu0 %246
  %v249 = vadd.f32 %v239, %v247
  %v250 = vtanh.pop %v249
  %252 = vrot.lane.b32.xlu0 %v250, 64
  %v253 = vpop.permute.xlu0 %252
  %v255 = vmul.f32 %v237, %v253
  %s256 = sadd.s32 0, 8
  %258 = vrot.lane.b32.xlu0 %v255, 32
  %v259 = vpop.permute.xlu0 %258
  %s261 = scalar_lea.vmem [#allocation2], %s256
  %262 = vst.msk [vmem:[%s261] sm:$0xff] %vm125, %v259
  %s263 = scalar_lea.vmem [#allocation3], 16
  %v264 = vld [vmem:[%s263] sm:$0xff]
  %v265 = vsel %vm125, %v259, 0
  %267 = vmatpush.msra.mxu0 0.0
  %268 = vmatpush.msra.mxu0 0.0
  %269 = vmatpush.msra.mxu0 0.0
  %270 = vmatpush.msra.mxu0 0.0
  %271 = vmatpush.msra.mxu0 0.0
  %272 = vmatpush.msra.mxu0 0.0
  %273 = vmatpush.msra.mxu0 0.0
  %274 = vmatpush.msra.mxu0 0.0
  %275 = vmatpush.msra.mxu0 0.0
  %276 = vmatpush.msra.mxu0 0.0
  %277 = vmatpush.msra.mxu0 0.0
  %278 = vmatpush.msra.mxu0 0.0
  %279 = vmatpush.msra.mxu0 %v37
  %280 = vmatpush.msra.mxu0 %v36
  %281 = vmatpush.msra.mxu0 %v35
  %282 = vmatpush.msra.mxu0 %v34
  %283 = vmatmul.f32.gmra.mxu0 %v265
  %v284 = vpop.f32.mrf.mxu0
  %v285 = vadd.f32 0.0, %v284
  %286 = vdwg.mxu0
  %v287 = vadd.f32 %v264, %v285
  %v288 = vxor.u32 %v287, 2147483648
  %v289 = vmul.f32 %v288, 1.442695
  %v290 = vpow.pop %v289
  %v291 = vadd.f32 %v290, 1.0
  %v292 = vrcp.pop %v291
  %v293 = vmul.f32 %v291, %v292
  %v294 = vsub.f32 1.0, %v293
  %v295 = vmul.f32 %v292, %v294
  %v296 = vadd.f32 %v292, %v295
  %vm297 = vweird.f32 %v291
  %vm298 = vweird.f32 %v292
  %vm299 = vmor %vm297, %vm298
  %v300 = vsel %vm299, %v292, %v296
  %v301 = vand.u32 2147483647, %v291
  %vm302 = vcmp.eq.f32.partialorder %v301, 8.507059e+37
  %v303 = vand.u32 %v291, 2147483648
  %v304 = vor.u32 1.1754944e-38, %v303
  %v305 = vsel %vm302, %v304, %v300
  %v306 = vmul.f32 1.0, %v305
  %v307 = vtanh.pop %v287
  %v308 = vmul.f32 %v306, %v249
  %310 = vrot.lane.b32.xlu0 %v307, 64
  %v311 = vpop.permute.xlu0 %310
  %v313 = vmul.f32 %v306, %v311
  %315 = vrot.lane.b32.xlu0 %v313, 32
  %v316 = vpop.permute.xlu0 %315
  %v318 = vadd.f32 %v308, %v316
  %v319 = vtanh.pop %v318
  %321 = vrot.lane.b32.xlu0 %v319, 64
  %v322 = vpop.permute.xlu0 %321
  %v324 = vmul.f32 %v306, %v322
  %s325 = sadd.s32 0, 16
  %327 = vrot.lane.b32.xlu0 %v324, 32
  %v328 = vpop.permute.xlu0 %327
  %s330 = scalar_lea.vmem [#allocation2], %s325
  %331 = vst.msk [vmem:[%s330] sm:$0xff] %vm125, %v328
  %s332 = scalar_lea.vmem [#allocation3], 24
  %v333 = vld [vmem:[%s332] sm:$0xff]
  %v334 = vsel %vm125, %v328, 0
  %336 = vmatpush.msra.mxu0 0.0
  %337 = vmatpush.msra.mxu0 0.0
  %338 = vmatpush.msra.mxu0 0.0
  %339 = vmatpush.msra.mxu0 0.0
  %340 = vmatpush.msra.mxu0 0.0
  %341 = vmatpush.msra.mxu0 0.0
  %342 = vmatpush.msra.mxu0 0.0
  %343 = vmatpush.msra.mxu0 0.0
  %344 = vmatpush.msra.mxu0 0.0
  %345 = vmatpush.msra.mxu0 0.0
  %346 = vmatpush.msra.mxu0 0.0
  %347 = vmatpush.msra.mxu0 0.0
  %348 = vmatpush.msra.mxu0 %v37
  %349 = vmatpush.msra.mxu0 %v36
  %350 = vmatpush.msra.mxu0 %v35
  %351 = vmatpush.msra.mxu0 %v34
  %352 = vmatmul.f32.gmra.mxu0 %v334
  %v353 = vpop.f32.mrf.mxu0
  %v354 = vadd.f32 0.0, %v353
  %355 = vdwg.mxu0
  %v356 = vadd.f32 %v333, %v354
  %v357 = vxor.u32 %v356, 2147483648
  %v358 = vmul.f32 %v357, 1.442695
  %v359 = vpow.pop %v358
  %v360 = vadd.f32 %v359, 1.0
  %v361 = vrcp.pop %v360
  %v362 = vmul.f32 %v360, %v361
  %v363 = vsub.f32 1.0, %v362
  %v364 = vmul.f32 %v361, %v363
  %v365 = vadd.f32 %v361, %v364
  %vm366 = vweird.f32 %v360
  %vm367 = vweird.f32 %v361
  %vm368 = vmor %vm366, %vm367
  %v369 = vsel %vm368, %v361, %v365
  %v370 = vand.u32 2147483647, %v360
  %vm371 = vcmp.eq.f32.partialorder %v370, 8.507059e+37
  %v372 = vand.u32 %v360, 2147483648
  %v373 = vor.u32 1.1754944e-38, %v372
  %v374 = vsel %vm371, %v373, %v369
  %v375 = vmul.f32 1.0, %v374
  %v376 = vtanh.pop %v356
  %v377 = vmul.f32 %v375, %v318
  %379 = vrot.lane.b32.xlu0 %v376, 64
  %v380 = vpop.permute.xlu0 %379
  %v382 = vmul.f32 %v375, %v380
  %384 = vrot.lane.b32.xlu0 %v382, 32
  %v385 = vpop.permute.xlu0 %384
  %v387 = vadd.f32 %v377, %v385
  %v388 = vtanh.pop %v387
  %390 = vrot.lane.b32.xlu0 %v388, 64
  %v391 = vpop.permute.xlu0 %390
  %v393 = vmul.f32 %v375, %v391
  %s394 = sadd.s32 0, 24
  %396 = vrot.lane.b32.xlu0 %v393, 32
  %v397 = vpop.permute.xlu0 %396
  %s399 = scalar_lea.vmem [#allocation2], %s394
  %400 = vst.msk [vmem:[%s399] sm:$0xff] %vm125, %v397
  %s401 = scalar_lea.vmem [#allocation3], 32
  %v402 = vld [vmem:[%s401] sm:$0xff]
  %v403 = vsel %vm125, %v397, 0
  %405 = vmatpush.msra.mxu0 0.0
  %406 = vmatpush.msra.mxu0 0.0
  %407 = vmatpush.msra.mxu0 0.0
  %408 = vmatpush.msra.mxu0 0.0
  %409 = vmatpush.msra.mxu0 0.0
  %410 = vmatpush.msra.mxu0 0.0
  %411 = vmatpush.msra.mxu0 0.0
  %412 = vmatpush.msra.mxu0 0.0
  %413 = vmatpush.msra.mxu0 0.0
  %414 = vmatpush.msra.mxu0 0.0
  %415 = vmatpush.msra.mxu0 0.0
  %416 = vmatpush.msra.mxu0 0.0
  %417 = vmatpush.msra.mxu0 %v37
  %418 = vmatpush.msra.mxu0 %v36
  %419 = vmatpush.msra.mxu0 %v35
  %420 = vmatpush.msra.mxu0 %v34
  %421 = vmatmul.f32.gmra.mxu0 %v403
  %v422 = vpop.f32.mrf.mxu0
  %v423 = vadd.f32 0.0, %v422
  %424 = vdwg.mxu0
  %v425 = vadd.f32 %v402, %v423
  %v426 = vxor.u32 %v425, 2147483648
  %v427 = vmul.f32 %v426, 1.442695
  %v428 = vpow.pop %v427
  %v429 = vadd.f32 %v428, 1.0
  %v430 = vrcp.pop %v429
  %v431 = vmul.f32 %v429, %v430
  %v432 = vsub.f32 1.0, %v431
  %v433 = vmul.f32 %v430, %v432
  %v434 = vadd.f32 %v430, %v433
  %vm435 = vweird.f32 %v429
  %vm436 = vweird.f32 %v430
  %vm437 = vmor %vm435, %vm436
  %v438 = vsel %vm437, %v430, %v434
  %v439 = vand.u32 2147483647, %v429
  %vm440 = vcmp.eq.f32.partialorder %v439, 8.507059e+37
  %v441 = vand.u32 %v429, 2147483648
  %v442 = vor.u32 1.1754944e-38, %v441
  %v443 = vsel %vm440, %v442, %v438
  %v444 = vmul.f32 1.0, %v443
  %v445 = vtanh.pop %v425
  %v446 = vmul.f32 %v444, %v387
  %448 = vrot.lane.b32.xlu0 %v445, 64
  %v449 = vpop.permute.xlu0 %448
  %v451 = vmul.f32 %v444, %v449
  %453 = vrot.lane.b32.xlu0 %v451, 32
  %v454 = vpop.permute.xlu0 %453
  %v456 = vadd.f32 %v446, %v454
  %v457 = vtanh.pop %v456
  %459 = vrot.lane.b32.xlu0 %v457, 64
  %v460 = vpop.permute.xlu0 %459
  %v462 = vmul.f32 %v444, %v460
  %s463 = sadd.s32 0, 32
  %465 = vrot.lane.b32.xlu0 %v462, 32
  %v466 = vpop.permute.xlu0 %465
  %s468 = scalar_lea.vmem [#allocation2], %s463
  %469 = vst.msk [vmem:[%s468] sm:$0xff] %vm125, %v466
  %s470 = scalar_lea.vmem [#allocation3], 40
  %v471 = vld [vmem:[%s470] sm:$0xff]
  %v472 = vsel %vm125, %v466, 0
  %474 = vmatpush.msra.mxu0 0.0
  %475 = vmatpush.msra.mxu0 0.0
  %476 = vmatpush.msra.mxu0 0.0
  %477 = vmatpush.msra.mxu0 0.0
  %478 = vmatpush.msra.mxu0 0.0
  %479 = vmatpush.msra.mxu0 0.0
  %480 = vmatpush.msra.mxu0 0.0
  %481 = vmatpush.msra.mxu0 0.0
  %482 = vmatpush.msra.mxu0 0.0
  %483 = vmatpush.msra.mxu0 0.0
  %484 = vmatpush.msra.mxu0 0.0
  %485 = vmatpush.msra.mxu0 0.0
  %486 = vmatpush.msra.mxu0 %v37
  %487 = vmatpush.msra.mxu0 %v36
  %488 = vmatpush.msra.mxu0 %v35
  %489 = vmatpush.msra.mxu0 %v34
  %490 = vmatmul.f32.gmra.mxu0 %v472
  %v491 = vpop.f32.mrf.mxu0
  %v492 = vadd.f32 0.0, %v491
  %493 = vdwg.mxu0
  %v494 = vadd.f32 %v471, %v492
  %v495 = vxor.u32 %v494, 2147483648
  %v496 = vmul.f32 %v495, 1.442695
  %v497 = vpow.pop %v496
  %v498 = vadd.f32 %v497, 1.0
  %v499 = vrcp.pop %v498
  %v500 = vmul.f32 %v498, %v499
  %v501 = vsub.f32 1.0, %v500
  %v502 = vmul.f32 %v499, %v501
  %v503 = vadd.f32 %v499, %v502
  %vm504 = vweird.f32 %v498
  %vm505 = vweird.f32 %v499
  %vm506 = vmor %vm504, %vm505
  %v507 = vsel %vm506, %v499, %v503
  %v508 = vand.u32 2147483647, %v498
  %vm509 = vcmp.eq.f32.partialorder %v508, 8.507059e+37
  %v510 = vand.u32 %v498, 2147483648
  %v511 = vor.u32 1.1754944e-38, %v510
  %v512 = vsel %vm509, %v511, %v507
  %v513 = vmul.f32 1.0, %v512
  %v514 = vtanh.pop %v494
  %v515 = vmul.f32 %v513, %v456
  %517 = vrot.lane.b32.xlu0 %v514, 64
  %v518 = vpop.permute.xlu0 %517
  %v520 = vmul.f32 %v513, %v518
  %522 = vrot.lane.b32.xlu0 %v520, 32
  %v523 = vpop.permute.xlu0 %522
  %v525 = vadd.f32 %v515, %v523
  %v526 = vtanh.pop %v525
  %528 = vrot.lane.b32.xlu0 %v526, 64
  %v529 = vpop.permute.xlu0 %528
  %v531 = vmul.f32 %v513, %v529
  %s532 = sadd.s32 0, 40
  %534 = vrot.lane.b32.xlu0 %v531, 32
  %v535 = vpop.permute.xlu0 %534
  %s537 = scalar_lea.vmem [#allocation2], %s532
  %538 = vst.msk [vmem:[%s537] sm:$0xff] %vm125, %v535
  %s539 = scalar_lea.vmem [#allocation3], 48
  %v540 = vld [vmem:[%s539] sm:$0xff]
  %v541 = vsel %vm125, %v535, 0
  %543 = vmatpush.msra.mxu0 0.0
  %544 = vmatpush.msra.mxu0 0.0
  %545 = vmatpush.msra.mxu0 0.0
  %546 = vmatpush.msra.mxu0 0.0
  %547 = vmatpush.msra.mxu0 0.0
  %548 = vmatpush.msra.mxu0 0.0
  %549 = vmatpush.msra.mxu0 0.0
  %550 = vmatpush.msra.mxu0 0.0
  %551 = vmatpush.msra.mxu0 0.0
  %552 = vmatpush.msra.mxu0 0.0
  %553 = vmatpush.msra.mxu0 0.0
  %554 = vmatpush.msra.mxu0 0.0
  %555 = vmatpush.msra.mxu0 %v37
  %556 = vmatpush.msra.mxu0 %v36
  %557 = vmatpush.msra.mxu0 %v35
  %558 = vmatpush.msra.mxu0 %v34
  %559 = vmatmul.f32.gmra.mxu0 %v541
  %v560 = vpop.f32.mrf.mxu0
  %v561 = vadd.f32 0.0, %v560
  %562 = vdwg.mxu0
  %v563 = vadd.f32 %v540, %v561
  %v564 = vxor.u32 %v563, 2147483648
  %v565 = vmul.f32 %v564, 1.442695
  %v566 = vpow.pop %v565
  %v567 = vadd.f32 %v566, 1.0
  %v568 = vrcp.pop %v567
  %v569 = vmul.f32 %v567, %v568
  %v570 = vsub.f32 1.0, %v569
  %v571 = vmul.f32 %v568, %v570
  %v572 = vadd.f32 %v568, %v571
  %vm573 = vweird.f32 %v567
  %vm574 = vweird.f32 %v568
  %vm575 = vmor %vm573, %vm574
  %v576 = vsel %vm575, %v568, %v572
  %v577 = vand.u32 2147483647, %v567
  %vm578 = vcmp.eq.f32.partialorder %v577, 8.507059e+37
  %v579 = vand.u32 %v567, 2147483648
  %v580 = vor.u32 1.1754944e-38, %v579
  %v581 = vsel %vm578, %v580, %v576
  %v582 = vmul.f32 1.0, %v581
  %v583 = vtanh.pop %v563
  %v584 = vmul.f32 %v582, %v525
  %586 = vrot.lane.b32.xlu0 %v583, 64
  %v587 = vpop.permute.xlu0 %586
  %v589 = vmul.f32 %v582, %v587
  %591 = vrot.lane.b32.xlu0 %v589, 32
  %v592 = vpop.permute.xlu0 %591
  %v594 = vadd.f32 %v584, %v592
  %v595 = vtanh.pop %v594
  %597 = vrot.lane.b32.xlu0 %v595, 64
  %v598 = vpop.permute.xlu0 %597
  %v600 = vmul.f32 %v582, %v598
  %s601 = sadd.s32 0, 48
  %603 = vrot.lane.b32.xlu0 %v600, 32
  %v604 = vpop.permute.xlu0 %603
  %s606 = scalar_lea.vmem [#allocation2], %s601
  %607 = vst.msk [vmem:[%s606] sm:$0xff] %vm125, %v604
  %s608 = scalar_lea.vmem [#allocation3], 56
  %v609 = vld [vmem:[%s608] sm:$0xff]
  %v610 = vsel %vm125, %v604, 0
  %612 = vmatpush.msra.mxu0 0.0
  %613 = vmatpush.msra.mxu0 0.0
  %614 = vmatpush.msra.mxu0 0.0
  %615 = vmatpush.msra.mxu0 0.0
  %616 = vmatpush.msra.mxu0 0.0
  %617 = vmatpush.msra.mxu0 0.0
  %618 = vmatpush.msra.mxu0 0.0
  %619 = vmatpush.msra.mxu0 0.0
  %620 = vmatpush.msra.mxu0 0.0
  %621 = vmatpush.msra.mxu0 0.0
  %622 = vmatpush.msra.mxu0 0.0
  %623 = vmatpush.msra.mxu0 0.0
  %624 = vmatpush.msra.mxu0 %v37
  %625 = vmatpush.msra.mxu0 %v36
  %626 = vmatpush.msra.mxu0 %v35
  %627 = vmatpush.msra.mxu0 %v34
  %628 = vmatmul.f32.gmra.mxu0 %v610
  %v629 = vpop.f32.mrf.mxu0
  %v630 = vadd.f32 0.0, %v629
  %631 = vdwg.mxu0
  %v632 = vadd.f32 %v609, %v630
  %v633 = vxor.u32 %v632, 2147483648
  %v634 = vmul.f32 %v633, 1.442695
  %v635 = vpow.pop %v634
  %v636 = vadd.f32 %v635, 1.0
  %v637 = vrcp.pop %v636
  %v638 = vmul.f32 %v636, %v637
  %v639 = vsub.f32 1.0, %v638
  %v640 = vmul.f32 %v637, %v639
  %v641 = vadd.f32 %v637, %v640
  %vm642 = vweird.f32 %v636
  %vm643 = vweird.f32 %v637
  %vm644 = vmor %vm642, %vm643
  %v645 = vsel %vm644, %v637, %v641
  %v646 = vand.u32 2147483647, %v636
  %vm647 = vcmp.eq.f32.partialorder %v646, 8.507059e+37
  %v648 = vand.u32 %v636, 2147483648
  %v649 = vor.u32 1.1754944e-38, %v648
  %v650 = vsel %vm647, %v649, %v645
  %v651 = vmul.f32 1.0, %v650
  %v652 = vtanh.pop %v632
  %v653 = vmul.f32 %v651, %v594
  %655 = vrot.lane.b32.xlu0 %v652, 64
  %v656 = vpop.permute.xlu0 %655
  %v658 = vmul.f32 %v651, %v656
  %660 = vrot.lane.b32.xlu0 %v658, 32
  %v661 = vpop.permute.xlu0 %660
  %v663 = vadd.f32 %v653, %v661
  %v664 = vtanh.pop %v663
  %666 = vrot.lane.b32.xlu0 %v664, 64
  %v667 = vpop.permute.xlu0 %666
  %v669 = vmul.f32 %v651, %v667
  %s670 = sadd.s32 0, 56
  %672 = vrot.lane.b32.xlu0 %v669, 32
  %v673 = vpop.permute.xlu0 %672
  %s675 = scalar_lea.vmem [#allocation2], %s670
  %676 = vst.msk [vmem:[%s675] sm:$0xff] %vm125, %v673
  %v677 = vld [vmem:[%s4] sm:$0xff]
  %v678 = vld [vmem:[%s4 + $0x8] sm:$0xff]
  %v679 = vld [vmem:[%s4 + $0x10] sm:$0xff]
  %v680 = vld [vmem:[%s4 + $0x18] sm:$0xff]
  %v681 = vld [vmem:[%s5] sm:$0xff]
  %v682 = vld [vmem:[%s5 + $0x8] sm:$0xff]
  %v683 = vld [vmem:[%s5 + $0x10] sm:$0xff]
  %v684 = vld [vmem:[%s5 + $0x18] sm:$0xff]
  %v685 = vld [vmem:[%s6] sm:$0x1]
  %v686 = vld [vmem:[#allocation2] sm:$0xff]
  %v687 = vld [vmem:[#allocation2 + $0x8] sm:$0xff]
  %v688 = vld [vmem:[#allocation2 + $0x10] sm:$0xff]
  %v689 = vld [vmem:[#allocation2 + $0x18] sm:$0xff]
  %v690 = vld [vmem:[#allocation2 + $0x20] sm:$0xff]
  %v691 = vld [vmem:[#allocation2 + $0x28] sm:$0xff]
  %v692 = vld [vmem:[#allocation2 + $0x30] sm:$0xff]
  %v693 = vld [vmem:[#allocation2 + $0x38] sm:$0xff]
  %v695 = vperm.slane %v685, 0
  %v698 = vsel %vm125, %v686, 0
  %v701 = vsel %vm125, %v687, 0
  %v704 = vsel %vm125, %v688, 0
  %v707 = vsel %vm125, %v689, 0
  %v710 = vsel %vm125, %v690, 0
  %v713 = vsel %vm125, %v691, 0
  %v716 = vsel %vm125, %v692, 0
  %v719 = vsel %vm125, %v693, 0
  %721 = vmatpush.msra.mxu0 0.0
  %722 = vmatpush.msra.mxu0 0.0
  %723 = vmatpush.msra.mxu0 0.0
  %724 = vmatpush.msra.mxu0 0.0
  %725 = vmatpush.msra.mxu0 0.0
  %726 = vmatpush.msra.mxu0 0.0
  %727 = vmatpush.msra.mxu0 0.0
  %728 = vmatpush.msra.mxu0 0.0
  %729 = vmatpush.msra.mxu0 0.0
  %730 = vmatpush.msra.mxu0 0.0
  %731 = vmatpush.msra.mxu0 0.0
  %732 = vmatpush.msra.mxu0 0.0
  %733 = vmatpush.msra.mxu0 %v680
  %734 = vmatpush.msra.mxu0 %v679
  %735 = vmatpush.msra.mxu0 %v678
  %736 = vmatpush.msra.mxu0 %v677
  %737 = vmatmul.f32.gmra.mxu0 %v698
  %v738 = vpop.f32.mrf.mxu0
  %v739 = vadd.f32 %v695, %v738
  %740 = vmatmul.f32.gmra.mxu0 %v701
  %v741 = vpop.f32.mrf.mxu0
  %v742 = vadd.f32 %v695, %v741
  %743 = vmatmul.f32.gmra.mxu0 %v704
  %v744 = vpop.f32.mrf.mxu0
  %v745 = vadd.f32 %v695, %v744
  %746 = vmatmul.f32.gmra.mxu0 %v707
  %v747 = vpop.f32.mrf.mxu0
  %v748 = vadd.f32 %v695, %v747
  %749 = vmatmul.f32.gmra.mxu0 %v710
  %v750 = vpop.f32.mrf.mxu0
  %v751 = vadd.f32 %v695, %v750
  %752 = vmatmul.f32.gmra.mxu0 %v713
  %v753 = vpop.f32.mrf.mxu0
  %v754 = vadd.f32 %v695, %v753
  %755 = vmatmul.f32.gmra.mxu0 %v716
  %v756 = vpop.f32.mrf.mxu0
  %v757 = vadd.f32 %v695, %v756
  %758 = vmatmul.f32.gmra.mxu0 %v719
  %v759 = vpop.f32.mrf.mxu0
  %v760 = vadd.f32 %v695, %v759
  %761 = vdwg.mxu0
  %762 = vst [vmem:[#allocation3] sm:$0xff] %v739
  %763 = vst [vmem:[#allocation3 + $0x8] sm:$0xff] %v742
  %764 = vst [vmem:[#allocation3 + $0x10] sm:$0xff] %v745
  %765 = vst [vmem:[#allocation3 + $0x18] sm:$0xff] %v748
  %766 = vst [vmem:[#allocation3 + $0x20] sm:$0xff] %v751
  %767 = vst [vmem:[#allocation3 + $0x28] sm:$0xff] %v754
  %768 = vst [vmem:[#allocation3 + $0x30] sm:$0xff] %v757
  %769 = vst [vmem:[#allocation3 + $0x38] sm:$0xff] %v760
  %v770 = vld [vmem:[#allocation3] sm:$0xff]
  %771 = vmatpush.msra.mxu0 0.0
  %772 = vmatpush.msra.mxu0 0.0
  %773 = vmatpush.msra.mxu0 0.0
  %774 = vmatpush.msra.mxu0 0.0
  %775 = vmatpush.msra.mxu0 0.0
  %776 = vmatpush.msra.mxu0 0.0
  %777 = vmatpush.msra.mxu0 0.0
  %778 = vmatpush.msra.mxu0 0.0
  %779 = vmatpush.msra.mxu0 0.0
  %780 = vmatpush.msra.mxu0 0.0
  %781 = vmatpush.msra.mxu0 0.0
  %782 = vmatpush.msra.mxu0 0.0
  %783 = vmatpush.msra.mxu0 %v684
  %784 = vmatpush.msra.mxu0 %v683
  %785 = vmatpush.msra.mxu0 %v682
  %786 = vmatpush.msra.mxu0 %v681
  %787 = vmatmul.f32.gmra.mxu0 %v127
  %v788 = vpop.f32.mrf.mxu0
  %v789 = vadd.f32 0.0, %v788
  %790 = vdwg.mxu0
  %v791 = vadd.f32 %v770, %v789
  %v792 = vxor.u32 %v791, 2147483648
  %v793 = vmul.f32 %v792, 1.442695
  %v794 = vpow.pop %v793
  %v795 = vadd.f32 %v794, 1.0
  %v796 = vrcp.pop %v795
  %v797 = vmul.f32 %v795, %v796
  %v798 = vsub.f32 1.0, %v797
  %v799 = vmul.f32 %v796, %v798
  %v800 = vadd.f32 %v796, %v799
  %vm801 = vweird.f32 %v795
  %vm802 = vweird.f32 %v796
  %vm803 = vmor %vm801, %vm802
  %v804 = vsel %vm803, %v796, %v800
  %v805 = vand.u32 2147483647, %v795
  %vm806 = vcmp.eq.f32.partialorder %v805, 8.507059e+37
  %v807 = vand.u32 %v795, 2147483648
  %v808 = vor.u32 1.1754944e-38, %v807
  %v809 = vsel %vm806, %v808, %v804
  %v810 = vmul.f32 1.0, %v809
  %v811 = vtanh.pop %v791
  %v812 = vmul.f32 %v810, 0.0
  %814 = vrot.lane.b32.xlu0 %v811, 64
  %v815 = vpop.permute.xlu0 %814
  %v817 = vmul.f32 %v810, %v815
  %819 = vrot.lane.b32.xlu0 %v817, 32
  %v820 = vpop.permute.xlu0 %819
  %v822 = vadd.f32 %v812, %v820
  %v823 = vtanh.pop %v822
  %825 = vrot.lane.b32.xlu0 %v823, 64
  %v826 = vpop.permute.xlu0 %825
  %v828 = vmul.f32 %v810, %v826
  %v829 = vld [vmem:[%s194] sm:$0xff]
  %831 = vrot.lane.b32.xlu0 %v828, 32
  %v832 = vpop.permute.xlu0 %831
  %v833 = vsel %vm125, %v832, 0
  %835 = vmatpush.msra.mxu0 0.0
  %836 = vmatpush.msra.mxu0 0.0
  %837 = vmatpush.msra.mxu0 0.0
  %838 = vmatpush.msra.mxu0 0.0
  %839 = vmatpush.msra.mxu0 0.0
  %840 = vmatpush.msra.mxu0 0.0
  %841 = vmatpush.msra.mxu0 0.0
  %842 = vmatpush.msra.mxu0 0.0
  %843 = vmatpush.msra.mxu0 0.0
  %844 = vmatpush.msra.mxu0 0.0
  %845 = vmatpush.msra.mxu0 0.0
  %846 = vmatpush.msra.mxu0 0.0
  %847 = vmatpush.msra.mxu0 %v684
  %848 = vmatpush.msra.mxu0 %v683
  %849 = vmatpush.msra.mxu0 %v682
  %850 = vmatpush.msra.mxu0 %v681
  %851 = vmatmul.f32.gmra.mxu0 %v833
  %v852 = vpop.f32.mrf.mxu0
  %v853 = vadd.f32 0.0, %v852
  %854 = vdwg.mxu0
  %v855 = vadd.f32 %v829, %v853
  %v856 = vxor.u32 %v855, 2147483648
  %v857 = vmul.f32 %v856, 1.442695
  %v858 = vpow.pop %v857
  %v859 = vadd.f32 %v858, 1.0
  %v860 = vrcp.pop %v859
  %v861 = vmul.f32 %v859, %v860
  %v862 = vsub.f32 1.0, %v861
  %v863 = vmul.f32 %v860, %v862
  %v864 = vadd.f32 %v860, %v863
  %vm865 = vweird.f32 %v859
  %vm866 = vweird.f32 %v860
  %vm867 = vmor %vm865, %vm866
  %v868 = vsel %vm867, %v860, %v864
  %v869 = vand.u32 2147483647, %v859
  %vm870 = vcmp.eq.f32.partialorder %v869, 8.507059e+37
  %v871 = vand.u32 %v859, 2147483648
  %v872 = vor.u32 1.1754944e-38, %v871
  %v873 = vsel %vm870, %v872, %v868
  %v874 = vmul.f32 1.0, %v873
  %v875 = vtanh.pop %v855
  %v876 = vmul.f32 %v874, %v822
  %878 = vrot.lane.b32.xlu0 %v875, 64
  %v879 = vpop.permute.xlu0 %878
  %v881 = vmul.f32 %v874, %v879
  %883 = vrot.lane.b32.xlu0 %v881, 32
  %v884 = vpop.permute.xlu0 %883
  %v886 = vadd.f32 %v876, %v884
  %v887 = vtanh.pop %v886
  %889 = vrot.lane.b32.xlu0 %v887, 64
  %v890 = vpop.permute.xlu0 %889
  %v892 = vmul.f32 %v874, %v890
  %v893 = vld [vmem:[%s263] sm:$0xff]
  %895 = vrot.lane.b32.xlu0 %v892, 32
  %v896 = vpop.permute.xlu0 %895
  %v897 = vsel %vm125, %v896, 0
  %899 = vmatpush.msra.mxu0 0.0
  %900 = vmatpush.msra.mxu0 0.0
  %901 = vmatpush.msra.mxu0 0.0
  %902 = vmatpush.msra.mxu0 0.0
  %903 = vmatpush.msra.mxu0 0.0
  %904 = vmatpush.msra.mxu0 0.0
  %905 = vmatpush.msra.mxu0 0.0
  %906 = vmatpush.msra.mxu0 0.0
  %907 = vmatpush.msra.mxu0 0.0
  %908 = vmatpush.msra.mxu0 0.0
  %909 = vmatpush.msra.mxu0 0.0
  %910 = vmatpush.msra.mxu0 0.0
  %911 = vmatpush.msra.mxu0 %v684
  %912 = vmatpush.msra.mxu0 %v683
  %913 = vmatpush.msra.mxu0 %v682
  %914 = vmatpush.msra.mxu0 %v681
  %915 = vmatmul.f32.gmra.mxu0 %v897
  %v916 = vpop.f32.mrf.mxu0
  %v917 = vadd.f32 0.0, %v916
  %918 = vdwg.mxu0
  %v919 = vadd.f32 %v893, %v917
  %v920 = vxor.u32 %v919, 2147483648
  %v921 = vmul.f32 %v920, 1.442695
  %v922 = vpow.pop %v921
  %v923 = vadd.f32 %v922, 1.0
  %v924 = vrcp.pop %v923
  %v925 = vmul.f32 %v923, %v924
  %v926 = vsub.f32 1.0, %v925
  %v927 = vmul.f32 %v924, %v926
  %v928 = vadd.f32 %v924, %v927
  %vm929 = vweird.f32 %v923
  %vm930 = vweird.f32 %v924
  %vm931 = vmor %vm929, %vm930
  %v932 = vsel %vm931, %v924, %v928
  %v933 = vand.u32 2147483647, %v923
  %vm934 = vcmp.eq.f32.partialorder %v933, 8.507059e+37
  %v935 = vand.u32 %v923, 2147483648
  %v936 = vor.u32 1.1754944e-38, %v935
  %v937 = vsel %vm934, %v936, %v932
  %v938 = vmul.f32 1.0, %v937
  %v939 = vtanh.pop %v919
  %v940 = vmul.f32 %v938, %v886
  %942 = vrot.lane.b32.xlu0 %v939, 64
  %v943 = vpop.permute.xlu0 %942
  %v945 = vmul.f32 %v938, %v943
  %947 = vrot.lane.b32.xlu0 %v945, 32
  %v948 = vpop.permute.xlu0 %947
  %v950 = vadd.f32 %v940, %v948
  %v951 = vtanh.pop %v950
  %953 = vrot.lane.b32.xlu0 %v951, 64
  %v954 = vpop.permute.xlu0 %953
  %v956 = vmul.f32 %v938, %v954
  %v957 = vld [vmem:[%s332] sm:$0xff]
  %959 = vrot.lane.b32.xlu0 %v956, 32
  %v960 = vpop.permute.xlu0 %959
  %v961 = vsel %vm125, %v960, 0
  %963 = vmatpush.msra.mxu0 0.0
  %964 = vmatpush.msra.mxu0 0.0
  %965 = vmatpush.msra.mxu0 0.0
  %966 = vmatpush.msra.mxu0 0.0
  %967 = vmatpush.msra.mxu0 0.0
  %968 = vmatpush.msra.mxu0 0.0
  %969 = vmatpush.msra.mxu0 0.0
  %970 = vmatpush.msra.mxu0 0.0
  %971 = vmatpush.msra.mxu0 0.0
  %972 = vmatpush.msra.mxu0 0.0
  %973 = vmatpush.msra.mxu0 0.0
  %974 = vmatpush.msra.mxu0 0.0
  %975 = vmatpush.msra.mxu0 %v684
  %976 = vmatpush.msra.mxu0 %v683
  %977 = vmatpush.msra.mxu0 %v682
  %978 = vmatpush.msra.mxu0 %v681
  %979 = vmatmul.f32.gmra.mxu0 %v961
  %v980 = vpop.f32.mrf.mxu0
  %v981 = vadd.f32 0.0, %v980
  %982 = vdwg.mxu0
  %v983 = vadd.f32 %v957, %v981
  %v984 = vxor.u32 %v983, 2147483648
  %v985 = vmul.f32 %v984, 1.442695
  %v986 = vpow.pop %v985
  %v987 = vadd.f32 %v986, 1.0
  %v988 = vrcp.pop %v987
  %v989 = vmul.f32 %v987, %v988
  %v990 = vsub.f32 1.0, %v989
  %v991 = vmul.f32 %v988, %v990
  %v992 = vadd.f32 %v988, %v991
  %vm993 = vweird.f32 %v987
  %vm994 = vweird.f32 %v988
  %vm995 = vmor %vm993, %vm994
  %v996 = vsel %vm995, %v988, %v992
  %v997 = vand.u32 2147483647, %v987
  %vm998 = vcmp.eq.f32.partialorder %v997, 8.507059e+37
  %v999 = vand.u32 %v987, 2147483648
  %v1000 = vor.u32 1.1754944e-38, %v999
  %v1001 = vsel %vm998, %v1000, %v996
  %v1002 = vmul.f32 1.0, %v1001
  %v1003 = vtanh.pop %v983
  %v1004 = vmul.f32 %v1002, %v950
  %1006 = vrot.lane.b32.xlu0 %v1003, 64
  %v1007 = vpop.permute.xlu0 %1006
  %v1009 = vmul.f32 %v1002, %v1007
  %1011 = vrot.lane.b32.xlu0 %v1009, 32
  %v1012 = vpop.permute.xlu0 %1011
  %v1014 = vadd.f32 %v1004, %v1012
  %v1015 = vtanh.pop %v1014
  %1017 = vrot.lane.b32.xlu0 %v1015, 64
  %v1018 = vpop.permute.xlu0 %1017
  %v1020 = vmul.f32 %v1002, %v1018
  %v1021 = vld [vmem:[%s401] sm:$0xff]
  %1023 = vrot.lane.b32.xlu0 %v1020, 32
  %v1024 = vpop.permute.xlu0 %1023
  %v1025 = vsel %vm125, %v1024, 0
  %1027 = vmatpush.msra.mxu0 0.0
  %1028 = vmatpush.msra.mxu0 0.0
  %1029 = vmatpush.msra.mxu0 0.0
  %1030 = vmatpush.msra.mxu0 0.0
  %1031 = vmatpush.msra.mxu0 0.0
  %1032 = vmatpush.msra.mxu0 0.0
  %1033 = vmatpush.msra.mxu0 0.0
  %1034 = vmatpush.msra.mxu0 0.0
  %1035 = vmatpush.msra.mxu0 0.0
  %1036 = vmatpush.msra.mxu0 0.0
  %1037 = vmatpush.msra.mxu0 0.0
  %1038 = vmatpush.msra.mxu0 0.0
  %1039 = vmatpush.msra.mxu0 %v684
  %1040 = vmatpush.msra.mxu0 %v683
  %1041 = vmatpush.msra.mxu0 %v682
  %1042 = vmatpush.msra.mxu0 %v681
  %1043 = vmatmul.f32.gmra.mxu0 %v1025
  %v1044 = vpop.f32.mrf.mxu0
  %v1045 = vadd.f32 0.0, %v1044
  %1046 = vdwg.mxu0
  %v1047 = vadd.f32 %v1021, %v1045
  %v1048 = vxor.u32 %v1047, 2147483648
  %v1049 = vmul.f32 %v1048, 1.442695
  %v1050 = vpow.pop %v1049
  %v1051 = vadd.f32 %v1050, 1.0
  %v1052 = vrcp.pop %v1051
  %v1053 = vmul.f32 %v1051, %v1052
  %v1054 = vsub.f32 1.0, %v1053
  %v1055 = vmul.f32 %v1052, %v1054
  %v1056 = vadd.f32 %v1052, %v1055
  %vm1057 = vweird.f32 %v1051
  %vm1058 = vweird.f32 %v1052
  %vm1059 = vmor %vm1057, %vm1058
  %v1060 = vsel %vm1059, %v1052, %v1056
  %v1061 = vand.u32 2147483647, %v1051
  %vm1062 = vcmp.eq.f32.partialorder %v1061, 8.507059e+37
  %v1063 = vand.u32 %v1051, 2147483648
  %v1064 = vor.u32 1.1754944e-38, %v1063
  %v1065 = vsel %vm1062, %v1064, %v1060
  %v1066 = vmul.f32 1.0, %v1065
  %v1067 = vtanh.pop %v1047
  %v1068 = vmul.f32 %v1066, %v1014
  %1070 = vrot.lane.b32.xlu0 %v1067, 64
  %v1071 = vpop.permute.xlu0 %1070
  %v1073 = vmul.f32 %v1066, %v1071
  %1075 = vrot.lane.b32.xlu0 %v1073, 32
  %v1076 = vpop.permute.xlu0 %1075
  %v1078 = vadd.f32 %v1068, %v1076
  %v1079 = vtanh.pop %v1078
  %1081 = vrot.lane.b32.xlu0 %v1079, 64
  %v1082 = vpop.permute.xlu0 %1081
  %v1084 = vmul.f32 %v1066, %v1082
  %v1085 = vld [vmem:[%s470] sm:$0xff]
  %1087 = vrot.lane.b32.xlu0 %v1084, 32
  %v1088 = vpop.permute.xlu0 %1087
  %v1089 = vsel %vm125, %v1088, 0
  %1091 = vmatpush.msra.mxu0 0.0
  %1092 = vmatpush.msra.mxu0 0.0
  %1093 = vmatpush.msra.mxu0 0.0
  %1094 = vmatpush.msra.mxu0 0.0
  %1095 = vmatpush.msra.mxu0 0.0
  %1096 = vmatpush.msra.mxu0 0.0
  %1097 = vmatpush.msra.mxu0 0.0
  %1098 = vmatpush.msra.mxu0 0.0
  %1099 = vmatpush.msra.mxu0 0.0
  %1100 = vmatpush.msra.mxu0 0.0
  %1101 = vmatpush.msra.mxu0 0.0
  %1102 = vmatpush.msra.mxu0 0.0
  %1103 = vmatpush.msra.mxu0 %v684
  %1104 = vmatpush.msra.mxu0 %v683
  %1105 = vmatpush.msra.mxu0 %v682
  %1106 = vmatpush.msra.mxu0 %v681
  %1107 = vmatmul.f32.gmra.mxu0 %v1089
  %v1108 = vpop.f32.mrf.mxu0
  %v1109 = vadd.f32 0.0, %v1108
  %1110 = vdwg.mxu0
  %v1111 = vadd.f32 %v1085, %v1109
  %v1112 = vxor.u32 %v1111, 2147483648
  %v1113 = vmul.f32 %v1112, 1.442695
  %v1114 = vpow.pop %v1113
  %v1115 = vadd.f32 %v1114, 1.0
  %v1116 = vrcp.pop %v1115
  %v1117 = vmul.f32 %v1115, %v1116
  %v1118 = vsub.f32 1.0, %v1117
  %v1119 = vmul.f32 %v1116, %v1118
  %v1120 = vadd.f32 %v1116, %v1119
  %vm1121 = vweird.f32 %v1115
  %vm1122 = vweird.f32 %v1116
  %vm1123 = vmor %vm1121, %vm1122
  %v1124 = vsel %vm1123, %v1116, %v1120
  %v1125 = vand.u32 2147483647, %v1115
  %vm1126 = vcmp.eq.f32.partialorder %v1125, 8.507059e+37
  %v1127 = vand.u32 %v1115, 2147483648
  %v1128 = vor.u32 1.1754944e-38, %v1127
  %v1129 = vsel %vm1126, %v1128, %v1124
  %v1130 = vmul.f32 1.0, %v1129
  %v1131 = vtanh.pop %v1111
  %v1132 = vmul.f32 %v1130, %v1078
  %1134 = vrot.lane.b32.xlu0 %v1131, 64
  %v1135 = vpop.permute.xlu0 %1134
  %v1137 = vmul.f32 %v1130, %v1135
  %1139 = vrot.lane.b32.xlu0 %v1137, 32
  %v1140 = vpop.permute.xlu0 %1139
  %v1142 = vadd.f32 %v1132, %v1140
  %v1143 = vtanh.pop %v1142
  %1145 = vrot.lane.b32.xlu0 %v1143, 64
  %v1146 = vpop.permute.xlu0 %1145
  %v1148 = vmul.f32 %v1130, %v1146
  %v1149 = vld [vmem:[%s539] sm:$0xff]
  %1151 = vrot.lane.b32.xlu0 %v1148, 32
  %v1152 = vpop.permute.xlu0 %1151
  %v1153 = vsel %vm125, %v1152, 0
  %1155 = vmatpush.msra.mxu0 0.0
  %1156 = vmatpush.msra.mxu0 0.0
  %1157 = vmatpush.msra.mxu0 0.0
  %1158 = vmatpush.msra.mxu0 0.0
  %1159 = vmatpush.msra.mxu0 0.0
  %1160 = vmatpush.msra.mxu0 0.0
  %1161 = vmatpush.msra.mxu0 0.0
  %1162 = vmatpush.msra.mxu0 0.0
  %1163 = vmatpush.msra.mxu0 0.0
  %1164 = vmatpush.msra.mxu0 0.0
  %1165 = vmatpush.msra.mxu0 0.0
  %1166 = vmatpush.msra.mxu0 0.0
  %1167 = vmatpush.msra.mxu0 %v684
  %1168 = vmatpush.msra.mxu0 %v683
  %1169 = vmatpush.msra.mxu0 %v682
  %1170 = vmatpush.msra.mxu0 %v681
  %1171 = vmatmul.f32.gmra.mxu0 %v1153
  %v1172 = vpop.f32.mrf.mxu0
  %v1173 = vadd.f32 0.0, %v1172
  %1174 = vdwg.mxu0
  %v1175 = vadd.f32 %v1149, %v1173
  %v1176 = vxor.u32 %v1175, 2147483648
  %v1177 = vmul.f32 %v1176, 1.442695
  %v1178 = vpow.pop %v1177
  %v1179 = vadd.f32 %v1178, 1.0
  %v1180 = vrcp.pop %v1179
  %v1181 = vmul.f32 %v1179, %v1180
  %v1182 = vsub.f32 1.0, %v1181
  %v1183 = vmul.f32 %v1180, %v1182
  %v1184 = vadd.f32 %v1180, %v1183
  %vm1185 = vweird.f32 %v1179
  %vm1186 = vweird.f32 %v1180
  %vm1187 = vmor %vm1185, %vm1186
  %v1188 = vsel %vm1187, %v1180, %v1184
  %v1189 = vand.u32 2147483647, %v1179
  %vm1190 = vcmp.eq.f32.partialorder %v1189, 8.507059e+37
  %v1191 = vand.u32 %v1179, 2147483648
  %v1192 = vor.u32 1.1754944e-38, %v1191
  %v1193 = vsel %vm1190, %v1192, %v1188
  %v1194 = vmul.f32 1.0, %v1193
  %v1195 = vtanh.pop %v1175
  %v1196 = vmul.f32 %v1194, %v1142
  %1198 = vrot.lane.b32.xlu0 %v1195, 64
  %v1199 = vpop.permute.xlu0 %1198
  %v1201 = vmul.f32 %v1194, %v1199
  %1203 = vrot.lane.b32.xlu0 %v1201, 32
  %v1204 = vpop.permute.xlu0 %1203
  %v1206 = vadd.f32 %v1196, %v1204
  %v1207 = vtanh.pop %v1206
  %1209 = vrot.lane.b32.xlu0 %v1207, 64
  %v1210 = vpop.permute.xlu0 %1209
  %v1212 = vmul.f32 %v1194, %v1210
  %v1213 = vld [vmem:[%s608] sm:$0xff]
  %1215 = vrot.lane.b32.xlu0 %v1212, 32
  %v1216 = vpop.permute.xlu0 %1215
  %v1217 = vsel %vm125, %v1216, 0
  %1219 = vmatpush.msra.mxu0 0.0
  %1220 = vmatpush.msra.mxu0 0.0
  %1221 = vmatpush.msra.mxu0 0.0
  %1222 = vmatpush.msra.mxu0 0.0
  %1223 = vmatpush.msra.mxu0 0.0
  %1224 = vmatpush.msra.mxu0 0.0
  %1225 = vmatpush.msra.mxu0 0.0
  %1226 = vmatpush.msra.mxu0 0.0
  %1227 = vmatpush.msra.mxu0 0.0
  %1228 = vmatpush.msra.mxu0 0.0
  %1229 = vmatpush.msra.mxu0 0.0
  %1230 = vmatpush.msra.mxu0 0.0
  %1231 = vmatpush.msra.mxu0 %v684
  %1232 = vmatpush.msra.mxu0 %v683
  %1233 = vmatpush.msra.mxu0 %v682
  %1234 = vmatpush.msra.mxu0 %v681
  %1235 = vmatmul.f32.gmra.mxu0 %v1217
  %v1236 = vpop.f32.mrf.mxu0
  %v1237 = vadd.f32 0.0, %v1236
  %1238 = vdwg.mxu0
  %v1239 = vadd.f32 %v1213, %v1237
  %v1240 = vxor.u32 %v1239, 2147483648
  %v1241 = vmul.f32 %v1240, 1.442695
  %v1242 = vpow.pop %v1241
  %v1243 = vadd.f32 %v1242, 1.0
  %v1244 = vrcp.pop %v1243
  %v1245 = vmul.f32 %v1243, %v1244
  %v1246 = vsub.f32 1.0, %v1245
  %v1247 = vmul.f32 %v1244, %v1246
  %v1248 = vadd.f32 %v1244, %v1247
  %vm1249 = vweird.f32 %v1243
  %vm1250 = vweird.f32 %v1244
  %vm1251 = vmor %vm1249, %vm1250
  %v1252 = vsel %vm1251, %v1244, %v1248
  %v1253 = vand.u32 2147483647, %v1243
  %vm1254 = vcmp.eq.f32.partialorder %v1253, 8.507059e+37
  %v1255 = vand.u32 %v1243, 2147483648
  %v1256 = vor.u32 1.1754944e-38, %v1255
  %v1257 = vsel %vm1254, %v1256, %v1252
  %v1258 = vmul.f32 1.0, %v1257
  %v1259 = vtanh.pop %v1239
  %v1260 = vmul.f32 %v1258, %v1206
  %1262 = vrot.lane.b32.xlu0 %v1259, 64
  %v1263 = vpop.permute.xlu0 %1262
  %v1265 = vmul.f32 %v1258, %v1263
  %1267 = vrot.lane.b32.xlu0 %v1265, 32
  %v1268 = vpop.permute.xlu0 %1267
  %v1270 = vadd.f32 %v1260, %v1268
  %v1271 = vtanh.pop %v1270
  %1273 = vrot.lane.b32.xlu0 %v1271, 64
  %v1274 = vpop.permute.xlu0 %1273
  %v1276 = vmul.f32 %v1258, %v1274
  %v1277 = vld [vmem:[%s7] sm:$0xff]
  %v1278 = vld [vmem:[%s7 + $0x8] sm:$0xff]
  %v1279 = vld [vmem:[%s7 + $0x10] sm:$0xff]
  %v1280 = vld [vmem:[%s7 + $0x18] sm:$0xff]
  %v1281 = vld [vmem:[%s8] sm:$0x1]
  %v1283 = vperm.slane %v1281, 0
  %1286 = vrot.lane.b32.xlu0 %v1276, 32
  %v1287 = vpop.permute.xlu0 %1286
  %v1288 = vsel %vm125, %v1287, 0
  %1290 = vmatpush.msra.mxu0 0.0
  %1291 = vmatpush.msra.mxu0 0.0
  %1292 = vmatpush.msra.mxu0 0.0
  %1293 = vmatpush.msra.mxu0 0.0
  %1294 = vmatpush.msra.mxu0 0.0
  %1295 = vmatpush.msra.mxu0 0.0
  %1296 = vmatpush.msra.mxu0 0.0
  %1297 = vmatpush.msra.mxu0 0.0
  %1298 = vmatpush.msra.mxu0 0.0
  %1299 = vmatpush.msra.mxu0 0.0
  %1300 = vmatpush.msra.mxu0 0.0
  %1301 = vmatpush.msra.mxu0 0.0
  %1302 = vmatpush.msra.mxu0 %v1280
  %1303 = vmatpush.msra.mxu0 %v1279
  %1304 = vmatpush.msra.mxu0 %v1278
  %1305 = vmatpush.msra.mxu0 %v1277
  %1306 = vmatmul.f32.gmra.mxu0 %v1288
  %v1307 = vpop.f32.mrf.mxu0
  %v1308 = vadd.f32 %v1283, %v1307
  %1309 = vdwg.mxu0
  %vm1310 = vcmask 80896
  %1311 = vst.msk [vmem:[%s9] sm:$0xff] %vm1310, %v1308
  // Predicated region
  $region38: #{lstm_speech_classifier_forward.1} parent=0 // pred_check
    _
  $region39: #{lstm_speech_classifier_forward.1} parent=0 // pred_check_branch
    %1313 = sbr.rel (0) target = $region41
  $region40: #{lstm_speech_classifier_forward.1} parent=0 // pred_region
    _
  $region41: #{lstm_speech_classifier_forward.1} parent=0 // pred_fallthru
    _
  // Predicated region
  $region42: #{lstm_speech_classifier_forward.1} parent=0 // pred_check
    _
  $region43: #{lstm_speech_classifier_forward.1} parent=0 // pred_check_branch
    %1315 = sbr.rel (0) target = $region45
  $region44: #{lstm_speech_classifier_forward.1} parent=0 // pred_region
    _
  $region45: #{lstm_speech_classifier_forward.1} parent=0 // pred_fallthru
    _

</llo_original>
